<compile_context>
chip_gen: v6e
topology: v6e:2x2x1
jax: 0.10.0
libtpu: 0.0.40
codegen_flags: <defaults>
</compile_context>

<pallas_src>
import functools
import math

import jax
import jax.numpy as jnp
from jax import lax
from jax.experimental import pallas as pl
from jax.experimental.pallas import tpu as pltpu


def _round_up(x, m):
    return (x + m - 1) // m * m


def _encoder_attn_kernel(q_ref, kv_ref, wq_ref, wkv_ref, wfc_ref, out_ref, *,
                         n_head, d_k, d_v, scale):
    """One grid step == one batch element, all heads fused.

    q_ref   : [1, Lq,  dec_dim]
    kv_ref  : [1, Lkv, enc_dim]
    wq_ref  : [dec_dim, H*d_k]          (all heads concatenated along lanes)
    wkv_ref : [enc_dim, H*d_k + H*d_v]  (all K-head weights, then all V-head weights)
    wfc_ref : [H*d_v, out_pad]          (output projection, zero-padded to 128 lanes)
    out_ref : [1, Lq, out_pad]
    """
    q = q_ref[0]      # [Lq,  dec_dim]
    kv = kv_ref[0]    # [Lkv, enc_dim]

    # All-head projections: two wide MXU matmuls instead of 3*H narrow ones.
    qp = jnp.dot(q, wq_ref[...], preferred_element_type=jnp.float32)     # [Lq, H*d_k]
    kvp = jnp.dot(kv, wkv_ref[...], preferred_element_type=jnp.float32)  # [Lkv, H*(d_k+d_v)]

    # Fold 1/sqrt(d_k) into the q projection (touches Lq*H*d_k elems, not Lq*Lkv*H).
    qp = qp * scale

    hk = n_head * d_k
    heads = []
    for h in range(n_head):  # H is small & static -> fully unrolled at trace time
        qh = qp[:, h * d_k:(h + 1) * d_k]              # [Lq,  d_k]
        kh = kvp[:, h * d_k:(h + 1) * d_k]             # [Lkv, d_k]
        vh = kvp[:, hk + h * d_v:hk + (h + 1) * d_v]   # [Lkv, d_v]

        # q @ k^T without materializing a transpose: contract last dim of both.
        s = lax.dot_general(qh, kh, (((1,), (1,)), ((), ())),
                            preferred_element_type=jnp.float32)           # [Lq, Lkv]

        # Numerically-stable softmax in f32 (kept on VPU/EUP even if matmuls go bf16).
        m = jnp.max(s, axis=-1, keepdims=True)
        p = jnp.exp(s - m)
        p = p * pl.reciprocal(jnp.sum(p, axis=-1, keepdims=True), approx=True)

        heads.append(jnp.dot(p, vh, preferred_element_type=jnp.float32))  # [Lq, d_v]

    a = jnp.concatenate(heads, axis=-1)                                   # [Lq, H*d_v]
    # Single fused output projection; out_pad (=128) lanes keep the store unmasked.
    out_ref[0] = jnp.dot(a, wfc_ref[...], preferred_element_type=jnp.float32)


def encoder_attention(dec_input, enc_output, wq, wk, wv, wfc):
    """wq: [H, dec_dim, d_k], wk: [H, enc_dim, d_k], wv: [H, enc_dim, d_v],
       wfc: [H, d_v, dec_dim]  (weights stored transposed for x @ W, split per head)."""
    B = dec_input.shape[0]
    dec_dim = dec_input.shape[-1]
    enc_dim = enc_output.shape[-1]
    dec_shape = dec_input.shape[1:-1]
    enc_shape = enc_output.shape[1:-1]
    Lq = int(math.prod(dec_shape))
    Lkv = int(math.prod(enc_shape))

    H, _, d_k = wq.shape
    d_v = wv.shape[-1]

    q = dec_input.reshape(B, Lq, dec_dim).astype(jnp.float32)
    kv = enc_output.reshape(B, Lkv, enc_dim).astype(jnp.float32)

    # Concatenate per-head weights so each projection is a single wide matmul.
    wq_cat = jnp.transpose(wq, (1, 0, 2)).reshape(dec_dim, H * d_k)   # [dec_dim, H*d_k]
    wk_cat = jnp.transpose(wk, (1, 0, 2)).reshape(enc_dim, H * d_k)   # [enc_dim, H*d_k]
    wv_cat = jnp.transpose(wv, (1, 0, 2)).reshape(enc_dim, H * d_v)   # [enc_dim, H*d_v]
    wkv_cat = jnp.concatenate([wk_cat, wv_cat], axis=-1)              # [enc_dim, H*(d_k+d_v)]
    wfc_cat = wfc.reshape(H * d_v, dec_dim)                           # [H*d_v, dec_dim]

    # Zero-pad output-projection lanes to a multiple of 128 -> lane-dense output store.
    out_pad = _round_up(dec_dim, 128)
    wfc_pad = jnp.pad(wfc_cat, ((0, 0), (0, out_pad - dec_dim)))

    kernel = functools.partial(
        _encoder_attn_kernel,
        n_head=H, d_k=d_k, d_v=d_v, scale=1.0 / math.sqrt(d_k))

    out = pl.pallas_call(
        kernel,
        out_shape=jax.ShapeDtypeStruct((B, Lq, out_pad), jnp.float32),
        grid_spec=pltpu.PrefetchScalarGridSpec(
            num_scalar_prefetch=0,
            grid=(B,),
            in_specs=[
                pl.BlockSpec((1, Lq, dec_dim), lambda b: (b, 0, 0)),
                pl.BlockSpec((1, Lkv, enc_dim), lambda b: (b, 0, 0)),
                pl.BlockSpec((dec_dim, H * d_k), lambda b: (0, 0)),
                pl.BlockSpec((enc_dim, H * (d_k + d_v)), lambda b: (0, 0)),
                pl.BlockSpec((H * d_v, out_pad), lambda b: (0, 0)),
            ],
            out_specs=pl.BlockSpec((1, Lq, out_pad), lambda b: (b, 0, 0)),
        ),
        compiler_params=pltpu.CompilerParams(
            dimension_semantics=("parallel",)),
    )(q, kv, wq_cat, wkv_cat, wfc_pad)

    out = out[:, :, :dec_dim]
    return out.reshape((B,) + dec_shape + (dec_dim,))


def _reference(dec_input, enc_output, wq, wk, wv, wfc):
    """Pure-JAX reference mirroring MultiHeadAttention.forward + FullAttention."""
    B = dec_input.shape[0]
    dec_dim = dec_input.shape[-1]
    q = dec_input.reshape(B, -1, dec_dim)
    kv = enc_output.reshape(B, -1, enc_output.shape[-1])
    qh = jnp.einsum("bld,hdk->bhlk", q, wq)
    kh = jnp.einsum("bld,hdk->bhlk", kv, wk)
    vh = jnp.einsum("bld,hdk->bhlk", kv, wv)
    s = jnp.einsum("bhqk,bhmk->bhqm", qh, kh) / math.sqrt(qh.shape[-1])
    p = jax.nn.softmax(s, axis=-1)
    a = jnp.einsum("bhqm,bhmv->bhqv", p, vh)
    o = jnp.einsum("bhqv,hvd->bqd", a, wfc)
    return o.reshape(dec_input.shape[:-1] + (dec_dim,))


if __name__ == "__main__":
    # Module hyper-parameters (small, consistent with EncoderAttention / MHA init)
    dec_shape = (4, 4)      # decoder spatial shape -> Lq = 16
    enc_shape = (2, 4)      # encoder spatial shape -> Lkv = 8
    dec_dim = 32
    enc_dim = 24
    proj_dim = 16           # proj_qk_dim == proj_v_dim
    n_head = 4
    n_layer = 2
    B = 2

    key = jax.random.PRNGKey(0)
    k_q, k_k, k_v, k_fc, k_x, k_e = jax.random.split(key, 6)

    # Deterministic weight init, same std semantics as the PyTorch module.
    # Stored already transposed for x @ W, split per head.
    wq = (jax.random.normal(k_q, (n_head, dec_dim, proj_dim), jnp.float32)
          / math.sqrt(dec_dim))
    wk = (jax.random.normal(k_k, (n_head, enc_dim, proj_dim), jnp.float32)
          / math.sqrt(enc_dim))
    wv = (jax.random.normal(k_v, (n_head, enc_dim, proj_dim), jnp.float32)
          / math.sqrt(enc_dim))
    wfc = (jax.random.normal(k_fc, (n_head, proj_dim, dec_dim), jnp.float32)
           / math.sqrt(dec_dim * n_layer))

    dec_input = jax.random.normal(k_x, (B,) + dec_shape + (dec_dim,), jnp.float32)
    enc_output = jax.random.normal(k_e, (B,) + enc_shape + (enc_dim,), jnp.float32)

    out = encoder_attention(dec_input, enc_output, wq, wk, wv, wfc)
    out = jax.block_until_ready(out)

    ref = _reference(dec_input, enc_output, wq, wk, wv, wfc)
    assert out.shape == (B,) + dec_shape + (dec_dim,)
    # Tolerance loosened vs. exact f32: approx=True softmax reciprocal introduces
    # ~1e-3-level relative error in the normalization.
    assert jnp.allclose(out, ref, atol=1e-2, rtol=1e-2), \
        float(jnp.max(jnp.abs(out - ref)))

    print("KERNEL_OK")
</pallas_src>

<mosaic_0001>
module attributes {stable_mosaic.version = 11 : i64} {
  func.func @_encoder_attn_kernel(%arg0: i32, %arg1: memref<1x16x32xf32, #tpu.memory_space<vmem>>, %arg2: memref<1x8x24xf32, #tpu.memory_space<vmem>>, %arg3: memref<32x64xf32, #tpu.memory_space<vmem>>, %arg4: memref<24x128xf32, #tpu.memory_space<vmem>>, %arg5: memref<64x128xf32, #tpu.memory_space<vmem>>, %arg6: memref<1x16x128xf32, #tpu.memory_space<vmem>>) attributes {dimension_semantics = [#tpu.dimension_semantics<parallel>], iteration_bounds = array<i64: 2>, scalar_prefetch = 0 : i64, scratch_operands = 0 : i64, tpu.core_type = #tpu.core_type<tc>, window_params = [{transform_indices = @transform_0, window_bounds = array<i64: 1, 16, 32>}, {transform_indices = @transform_1, window_bounds = array<i64: 1, 8, 24>}, {pipeline_mode = #tpu.pipeline_mode<synchronous>, transform_indices = @transform_2, window_bounds = array<i64: 32, 64>}, {pipeline_mode = #tpu.pipeline_mode<synchronous>, transform_indices = @transform_3, window_bounds = array<i64: 24, 128>}, {pipeline_mode = #tpu.pipeline_mode<synchronous>, transform_indices = @transform_4, window_bounds = array<i64: 64, 128>}, {transform_indices = @transform_5, window_bounds = array<i64: 1, 16, 128>}]} {
    %c0 = arith.constant 0 : index
    %c0_0 = arith.constant 0 : index
    %c0_1 = arith.constant 0 : index
    %0 = vector.load %arg1[%c0, %c0_0, %c0_1] : memref<1x16x32xf32, #tpu.memory_space<vmem>>, vector<1x16x32xf32>
    %1 = vector.shape_cast %0 : vector<1x16x32xf32> to vector<16x32xf32>
    %c0_2 = arith.constant 0 : index
    %c0_3 = arith.constant 0 : index
    %c0_4 = arith.constant 0 : index
    %2 = vector.load %arg2[%c0_2, %c0_3, %c0_4] : memref<1x8x24xf32, #tpu.memory_space<vmem>>, vector<1x8x24xf32>
    %3 = vector.shape_cast %2 : vector<1x8x24xf32> to vector<8x24xf32>
    %c0_5 = arith.constant 0 : index
    %c0_6 = arith.constant 0 : index
    %4 = vector.load %arg3[%c0_5, %c0_6] : memref<32x64xf32, #tpu.memory_space<vmem>>, vector<32x64xf32>
    %cst = arith.constant dense<0.000000e+00> : vector<16x64xf32>
    %5 = tpu.matmul %1, %4, %cst {dimension_numbers = #tpu.dot_dimension_numbers<[1], [0], [0], [1], [0, 0, 1, 1], [], []>} : vector<16x32xf32>, vector<32x64xf32>, vector<16x64xf32> -> vector<16x64xf32>
    %c0_7 = arith.constant 0 : index
    %c0_8 = arith.constant 0 : index
    %6 = vector.load %arg4[%c0_7, %c0_8] : memref<24x128xf32, #tpu.memory_space<vmem>>, vector<24x128xf32>
    %cst_9 = arith.constant dense<0.000000e+00> : vector<8x128xf32>
    %7 = tpu.matmul %3, %6, %cst_9 {dimension_numbers = #tpu.dot_dimension_numbers<[1], [0], [0], [1], [0, 0, 1, 1], [], []>} : vector<8x24xf32>, vector<24x128xf32>, vector<8x128xf32> -> vector<8x128xf32>
    %cst_10 = arith.constant 2.500000e-01 : f32
    %8 = vector.broadcast %cst_10 : f32 to vector<16x64xf32>
    %9 = arith.mulf %5, %8 : vector<16x64xf32>
    %10 = vector.extract_strided_slice %9 {offsets = [0, 0], sizes = [16, 16], strides = [1, 1]} : vector<16x64xf32> to vector<16x16xf32>
    %11 = vector.extract_strided_slice %7 {offsets = [0, 0], sizes = [8, 16], strides = [1, 1]} : vector<8x128xf32> to vector<8x16xf32>
    %12 = vector.extract_strided_slice %7 {offsets = [0, 64], sizes = [8, 16], strides = [1, 1]} : vector<8x128xf32> to vector<8x16xf32>
    %cst_11 = arith.constant dense<0.000000e+00> : vector<16x8xf32>
    %13 = tpu.matmul %10, %11, %cst_11 {dimension_numbers = #tpu.dot_dimension_numbers<[1], [1], [0], [0], [0, 0, 1, 0], [], []>} : vector<16x16xf32>, vector<8x16xf32>, vector<16x8xf32> -> vector<16x8xf32>
    %cst_12 = arith.constant dense<0xFF800000> : vector<16xf32>
    %14 = vector.multi_reduction <maximumf>, %13, %cst_12 [1] : vector<16x8xf32> to vector<16xf32>
    %15 = vector.shape_cast %14 : vector<16xf32> to vector<16x1xf32>
    %16 = vector.broadcast %15 : vector<16x1xf32> to vector<16x8xf32>
    %17 = arith.subf %13, %16 : vector<16x8xf32>
    %18 = math.exp %17 : vector<16x8xf32>
    %cst_13 = arith.constant dense<0.000000e+00> : vector<16xf32>
    %19 = vector.multi_reduction <add>, %18, %cst_13 [1] : vector<16x8xf32> to vector<16xf32>
    %20 = vector.shape_cast %19 : vector<16xf32> to vector<16x1xf32>
    %21 = tpu.reciprocal %20 {approx = true} : vector<16x1xf32> -> vector<16x1xf32>
    %22 = vector.broadcast %21 : vector<16x1xf32> to vector<16x8xf32>
    %23 = arith.mulf %18, %22 : vector<16x8xf32>
    %cst_14 = arith.constant dense<0.000000e+00> : vector<16x16xf32>
    %24 = tpu.matmul %23, %12, %cst_14 {dimension_numbers = #tpu.dot_dimension_numbers<[1], [0], [0], [1], [0, 0, 1, 1], [], []>} : vector<16x8xf32>, vector<8x16xf32>, vector<16x16xf32> -> vector<16x16xf32>
    %25 = vector.extract_strided_slice %9 {offsets = [0, 16], sizes = [16, 16], strides = [1, 1]} : vector<16x64xf32> to vector<16x16xf32>
    %26 = vector.extract_strided_slice %7 {offsets = [0, 16], sizes = [8, 16], strides = [1, 1]} : vector<8x128xf32> to vector<8x16xf32>
    %27 = vector.extract_strided_slice %7 {offsets = [0, 80], sizes = [8, 16], strides = [1, 1]} : vector<8x128xf32> to vector<8x16xf32>
    %cst_15 = arith.constant dense<0.000000e+00> : vector<16x8xf32>
    %28 = tpu.matmul %25, %26, %cst_15 {dimension_numbers = #tpu.dot_dimension_numbers<[1], [1], [0], [0], [0, 0, 1, 0], [], []>} : vector<16x16xf32>, vector<8x16xf32>, vector<16x8xf32> -> vector<16x8xf32>
    %cst_16 = arith.constant dense<0xFF800000> : vector<16xf32>
    %29 = vector.multi_reduction <maximumf>, %28, %cst_16 [1] : vector<16x8xf32> to vector<16xf32>
    %30 = vector.shape_cast %29 : vector<16xf32> to vector<16x1xf32>
    %31 = vector.broadcast %30 : vector<16x1xf32> to vector<16x8xf32>
    %32 = arith.subf %28, %31 : vector<16x8xf32>
    %33 = math.exp %32 : vector<16x8xf32>
    %cst_17 = arith.constant dense<0.000000e+00> : vector<16xf32>
    %34 = vector.multi_reduction <add>, %33, %cst_17 [1] : vector<16x8xf32> to vector<16xf32>
    %35 = vector.shape_cast %34 : vector<16xf32> to vector<16x1xf32>
    %36 = tpu.reciprocal %35 {approx = true} : vector<16x1xf32> -> vector<16x1xf32>
    %37 = vector.broadcast %36 : vector<16x1xf32> to vector<16x8xf32>
    %38 = arith.mulf %33, %37 : vector<16x8xf32>
    %cst_18 = arith.constant dense<0.000000e+00> : vector<16x16xf32>
    %39 = tpu.matmul %38, %27, %cst_18 {dimension_numbers = #tpu.dot_dimension_numbers<[1], [0], [0], [1], [0, 0, 1, 1], [], []>} : vector<16x8xf32>, vector<8x16xf32>, vector<16x16xf32> -> vector<16x16xf32>
    %40 = vector.extract_strided_slice %9 {offsets = [0, 32], sizes = [16, 16], strides = [1, 1]} : vector<16x64xf32> to vector<16x16xf32>
    %41 = vector.extract_strided_slice %7 {offsets = [0, 32], sizes = [8, 16], strides = [1, 1]} : vector<8x128xf32> to vector<8x16xf32>
    %42 = vector.extract_strided_slice %7 {offsets = [0, 96], sizes = [8, 16], strides = [1, 1]} : vector<8x128xf32> to vector<8x16xf32>
    %cst_19 = arith.constant dense<0.000000e+00> : vector<16x8xf32>
    %43 = tpu.matmul %40, %41, %cst_19 {dimension_numbers = #tpu.dot_dimension_numbers<[1], [1], [0], [0], [0, 0, 1, 0], [], []>} : vector<16x16xf32>, vector<8x16xf32>, vector<16x8xf32> -> vector<16x8xf32>
    %cst_20 = arith.constant dense<0xFF800000> : vector<16xf32>
    %44 = vector.multi_reduction <maximumf>, %43, %cst_20 [1] : vector<16x8xf32> to vector<16xf32>
    %45 = vector.shape_cast %44 : vector<16xf32> to vector<16x1xf32>
    %46 = vector.broadcast %45 : vector<16x1xf32> to vector<16x8xf32>
    %47 = arith.subf %43, %46 : vector<16x8xf32>
    %48 = math.exp %47 : vector<16x8xf32>
    %cst_21 = arith.constant dense<0.000000e+00> : vector<16xf32>
    %49 = vector.multi_reduction <add>, %48, %cst_21 [1] : vector<16x8xf32> to vector<16xf32>
    %50 = vector.shape_cast %49 : vector<16xf32> to vector<16x1xf32>
    %51 = tpu.reciprocal %50 {approx = true} : vector<16x1xf32> -> vector<16x1xf32>
    %52 = vector.broadcast %51 : vector<16x1xf32> to vector<16x8xf32>
    %53 = arith.mulf %48, %52 : vector<16x8xf32>
    %cst_22 = arith.constant dense<0.000000e+00> : vector<16x16xf32>
    %54 = tpu.matmul %53, %42, %cst_22 {dimension_numbers = #tpu.dot_dimension_numbers<[1], [0], [0], [1], [0, 0, 1, 1], [], []>} : vector<16x8xf32>, vector<8x16xf32>, vector<16x16xf32> -> vector<16x16xf32>
    %55 = vector.extract_strided_slice %9 {offsets = [0, 48], sizes = [16, 16], strides = [1, 1]} : vector<16x64xf32> to vector<16x16xf32>
    %56 = vector.extract_strided_slice %7 {offsets = [0, 48], sizes = [8, 16], strides = [1, 1]} : vector<8x128xf32> to vector<8x16xf32>
    %57 = vector.extract_strided_slice %7 {offsets = [0, 112], sizes = [8, 16], strides = [1, 1]} : vector<8x128xf32> to vector<8x16xf32>
    %cst_23 = arith.constant dense<0.000000e+00> : vector<16x8xf32>
    %58 = tpu.matmul %55, %56, %cst_23 {dimension_numbers = #tpu.dot_dimension_numbers<[1], [1], [0], [0], [0, 0, 1, 0], [], []>} : vector<16x16xf32>, vector<8x16xf32>, vector<16x8xf32> -> vector<16x8xf32>
    %cst_24 = arith.constant dense<0xFF800000> : vector<16xf32>
    %59 = vector.multi_reduction <maximumf>, %58, %cst_24 [1] : vector<16x8xf32> to vector<16xf32>
    %60 = vector.shape_cast %59 : vector<16xf32> to vector<16x1xf32>
    %61 = vector.broadcast %60 : vector<16x1xf32> to vector<16x8xf32>
    %62 = arith.subf %58, %61 : vector<16x8xf32>
    %63 = math.exp %62 : vector<16x8xf32>
    %cst_25 = arith.constant dense<0.000000e+00> : vector<16xf32>
    %64 = vector.multi_reduction <add>, %63, %cst_25 [1] : vector<16x8xf32> to vector<16xf32>
    %65 = vector.shape_cast %64 : vector<16xf32> to vector<16x1xf32>
    %66 = tpu.reciprocal %65 {approx = true} : vector<16x1xf32> -> vector<16x1xf32>
    %67 = vector.broadcast %66 : vector<16x1xf32> to vector<16x8xf32>
    %68 = arith.mulf %63, %67 : vector<16x8xf32>
    %cst_26 = arith.constant dense<0.000000e+00> : vector<16x16xf32>
    %69 = tpu.matmul %68, %57, %cst_26 {dimension_numbers = #tpu.dot_dimension_numbers<[1], [0], [0], [1], [0, 0, 1, 1], [], []>} : vector<16x8xf32>, vector<8x16xf32>, vector<16x16xf32> -> vector<16x16xf32>
    %70 = tpu.concatenate %24, %39, %54, %69 in 1 : vector<16x16xf32>, vector<16x16xf32>, vector<16x16xf32>, vector<16x16xf32> -> vector<16x64xf32>
    %c0_27 = arith.constant 0 : index
    %c0_28 = arith.constant 0 : index
    %71 = vector.load %arg5[%c0_27, %c0_28] : memref<64x128xf32, #tpu.memory_space<vmem>>, vector<64x128xf32>
    %cst_29 = arith.constant dense<0.000000e+00> : vector<16x128xf32>
    %72 = tpu.matmul %70, %71, %cst_29 {dimension_numbers = #tpu.dot_dimension_numbers<[1], [0], [0], [1], [0, 0, 1, 1], [], []>} : vector<16x64xf32>, vector<64x128xf32>, vector<16x128xf32> -> vector<16x128xf32>
    %c0_30 = arith.constant 0 : index
    %c0_31 = arith.constant 0 : index
    %c0_32 = arith.constant 0 : index
    %73 = vector.load %arg6[%c0_30, %c0_31, %c0_32] : memref<1x16x128xf32, #tpu.memory_space<vmem>>, vector<1x16x128xf32>
    %74 = vector.shape_cast %73 : vector<1x16x128xf32> to vector<16x128xf32>
    %75 = vector.shape_cast %72 : vector<16x128xf32> to vector<1x16x128xf32>
    tpu.vector_store %arg6[%c0_30, %c0_31, %c0_32], %75 {strides = array<i32>} : memref<1x16x128xf32, #tpu.memory_space<vmem>>, vector<1x16x128xf32>,
    return
  }
  func.func @transform_0(%arg0: i32) -> (i32, i32, i32) {
    %c0_i32 = arith.constant 0 : i32
    %c0_i32_0 = arith.constant 0 : i32
    %c0_i32_1 = arith.constant 0 : i32
    return %arg0, %c0_i32, %c0_i32_0 : i32, i32, i32
  }
  func.func @transform_1(%arg0: i32) -> (i32, i32, i32) {
    %c0_i32 = arith.constant 0 : i32
    %c0_i32_0 = arith.constant 0 : i32
    %c0_i32_1 = arith.constant 0 : i32
    return %arg0, %c0_i32, %c0_i32_0 : i32, i32, i32
  }
  func.func @transform_2(%arg0: i32) -> (i32, i32) {
    %c0_i32 = arith.constant 0 : i32
    %c0_i32_0 = arith.constant 0 : i32
    %c0_i32_1 = arith.constant 0 : i32
    return %c0_i32, %c0_i32_0 : i32, i32
  }
  func.func @transform_3(%arg0: i32) -> (i32, i32) {
    %c0_i32 = arith.constant 0 : i32
    %c0_i32_0 = arith.constant 0 : i32
    %c0_i32_1 = arith.constant 0 : i32
    return %c0_i32, %c0_i32_0 : i32, i32
  }
  func.func @transform_4(%arg0: i32) -> (i32, i32) {
    %c0_i32 = arith.constant 0 : i32
    %c0_i32_0 = arith.constant 0 : i32
    %c0_i32_1 = arith.constant 0 : i32
    return %c0_i32, %c0_i32_0 : i32, i32
  }
  func.func @transform_5(%arg0: i32) -> (i32, i32, i32) {
    %c0_i32 = arith.constant 0 : i32
    %c0_i32_0 = arith.constant 0 : i32
    %c0_i32_1 = arith.constant 0 : i32
    return %arg0, %c0_i32, %c0_i32_0 : i32, i32, i32
  }
}

</mosaic_0001>

<llo_original>
// kernel: tpu_custom_call.1
$region0: #{tpu_custom_call.1}
  #allocation0 [shape = 'u32[]', space=smem, size = 0x4, offset = 0x4, fixed_abs, tag = 'smem constant byte address 0x4 - core index']
  #allocation1 [shape = 'u32[144,128]{1,0:T(1,128)}', space=vmem, size = 0x12000, scoped, tag = 'internal scratch']
  %s0 = inlined_call_operand.hbm [shape: f32[2,16,32], index: 0, kind: input, shape index: {}]
  %s1 = inlined_call_operand.hbm [shape: f32[2,8,24], index: 1, kind: input, shape index: {}]
  %s2 = inlined_call_operand.hbm [shape: f32[32,64], index: 2, kind: input, shape index: {}]
  %s3 = inlined_call_operand.hbm [shape: f32[24,128], index: 3, kind: input, shape index: {}]
  %s4 = inlined_call_operand.hbm [shape: f32[64,128], index: 4, kind: input, shape index: {}]
  %s5 = inlined_call_operand.hbm [shape: f32[2,16,128], index: 5, kind: output, shape index: {}]
  %s6 = sld [smem:[#allocation0]]
  $region73: #{tpu_custom_call.1} parent=0
    _
  %s8 = ssub.s32 1, %s6
  %s9 = scalar_select 0, %s8, %s6
  $region1: #{tpu_custom_call.1} parent=0
    #allocation2 [shape = 'u8[16384]{0}', space=vmem, size = 0x4000, scoped, tag = 'input window, operand 0']
    #allocation3 [shape = 's32[2]{0}', space=sflag, size = 0x8, scoped, tag = 'scoped memory for tpu_custom_call.1']
    #allocation4 [shape = 's32[2]{0}', space=sflag, size = 0x8, scoped, tag = 'scoped memory for tpu_custom_call.1']
    #allocation5 [shape = 'u8[8192]{0}', space=vmem, size = 0x2000, scoped, tag = 'input window, operand 1']
    #allocation6 [shape = 's32[2]{0}', space=sflag, size = 0x8, scoped, tag = 'scoped memory for tpu_custom_call.1']
    #allocation7 [shape = 'u8[16384]{0}', space=vmem, size = 0x4000, scoped, tag = 'input window, operand 2, single buffered']
    #allocation8 [shape = 'u8[12288]{0}', space=vmem, size = 0x3000, scoped, tag = 'input window, operand 3, single buffered']
    #allocation9 [shape = 's32[1]{0}', space=sflag, size = 0x4, scoped, tag = 'scoped memory for tpu_custom_call.1']
    #allocation10 [shape = 'u8[32768]{0}', space=vmem, size = 0x8000, scoped, tag = 'input window, operand 4, single buffered']
    #allocation11 [shape = 'u8[16384]{0}', space=vmem, size = 0x4000, scoped, tag = 'output window, operand 0']
    %10 = vsyncpa [#allocation3], 0
    %s11 = scalar_lea.sflag [#allocation3], 1
    %12 = vsyncpa %s11, 0
    %13 = vsyncpa [#allocation6], 0
    %s14 = scalar_lea.sflag [#allocation6], 1
    %15 = vsyncpa %s14, 0
    %16 = vsyncpa [#allocation9], 0
    %17 = vsyncpa [#allocation4], 0
    %s18 = scalar_lea.sflag [#allocation4], 1
    %19 = vsyncpa %s18, 0
    loop: start=0, step=1, limit=4
    $region2: #{tpu_custom_call.1} parent=1 // loop_pre_header
      _
    $region3: #{tpu_custom_call.1} parent=1 // loop_header
      %s21 = sphi 0, %s25
      %p22 = scmp.ge.s32.totalorder %s21, 4
      %s31 = sphi 0, %s33
      %s34 = sphi 0, %s31
      %s35 = sphi 0, %s34
      %s51 = sphi 0, %s35
      %s57 = sphi 0, %s59
      %s60 = sphi 0, %s57
      %s61 = sphi 0, %s60
      %s77 = sphi 0, %s61
      %s81 = sphi 0, %s81
      %s83 = sphi 0, %s81
      %s84 = sphi 0, %s83
      %s98 = sphi 0, %s84
      %s102 = sphi 0, %s102
      %s104 = sphi 0, %s102
      %s105 = sphi 0, %s104
      %s119 = sphi 0, %s105
      %s123 = sphi 0, %s123
      %s125 = sphi 0, %s123
      %s126 = sphi 0, %s125
      %s140 = sphi 0, %s126
      %s146 = sphi 0, %s148
      %s149 = sphi 0, %s146
      %s150 = sphi 0, %s149
      %s166 = sphi 0, %s150
    $region4: #{tpu_custom_call.1} parent=1 // loop_header_branch
      %24 = sbr.rel (%p22) target = $region8
    $region5: #{tpu_custom_call.1} parent=1 // loop_body
      %s26 = ssub.s32 %s21, 1
      %s27 = ssub.s32 %s21, 2
      %s28 = sadd.s32 %s21, 1
      %s29 = ssub.s32 %s21, %s28
      %p30 = scmp.eq.s32.totalorder %s29, 0
      %s32 = sadd.s32 %s31, 1
      %s33 = scalar_select %p30, %s31, %s32
      %p36 = pneg %p30
      %p37 = scmp.eq.s32.totalorder %s21, 1
      %p38 = por %p36, %p37
      %p39 = scmp.ne.s32.totalorder %s31, %s34
      %p40 = scmp.eq.s32.totalorder %s21, 0
      %p41 = por %p39, %p40
      %p42 = scmp.ne.s32.totalorder %s31, %s34
      %p43 = scmp.eq.s32.totalorder %s26, 1
      %p44 = por %p42, %p43
      %p45 = scmp.ne.s32.totalorder %s34, %s35
      %p46 = scmp.eq.s32.totalorder %s26, 0
      %p47 = por %p45, %p46
      %p48 = scmp.ne.s32.totalorder %s34, %s35
      %p49 = scmp.eq.s32.totalorder %s27, 1
      %p50 = por %p48, %p49
      %p52 = scmp.ne.s32.totalorder %s35, %s51
      %p53 = scmp.eq.s32.totalorder %s27, 0
      %p54 = por %p52, %p53
      %s55 = ssub.s32 %s21, %s28
      %p56 = scmp.eq.s32.totalorder %s55, 0
      %s58 = sadd.s32 %s57, 1
      %s59 = scalar_select %p56, %s57, %s58
      %p62 = pneg %p56
      %p63 = scmp.eq.s32.totalorder %s21, 1
      %p64 = por %p62, %p63
      %p65 = scmp.ne.s32.totalorder %s57, %s60
      %p66 = scmp.eq.s32.totalorder %s21, 0
      %p67 = por %p65, %p66
      %p68 = scmp.ne.s32.totalorder %s57, %s60
      %p69 = scmp.eq.s32.totalorder %s26, 1
      %p70 = por %p68, %p69
      %p71 = scmp.ne.s32.totalorder %s60, %s61
      %p72 = scmp.eq.s32.totalorder %s26, 0
      %p73 = por %p71, %p72
      %p74 = scmp.ne.s32.totalorder %s60, %s61
      %p75 = scmp.eq.s32.totalorder %s27, 1
      %p76 = por %p74, %p75
      %p78 = scmp.ne.s32.totalorder %s61, %s77
      %p79 = scmp.eq.s32.totalorder %s27, 0
      %p80 = por %p78, %p79
      %s82 = sadd.s32 %s81, 1
      %p85 = scmp.eq.s32.totalorder %s21, 1
      %p86 = scmp.ne.s32.totalorder %s81, %s83
      %p87 = scmp.eq.s32.totalorder %s21, 0
      %p88 = por %p86, %p87
      %p89 = scmp.ne.s32.totalorder %s81, %s83
      %p90 = scmp.eq.s32.totalorder %s26, 1
      %p91 = por %p89, %p90
      %p92 = scmp.ne.s32.totalorder %s83, %s84
      %p93 = scmp.eq.s32.totalorder %s26, 0
      %p94 = por %p92, %p93
      %p95 = scmp.ne.s32.totalorder %s83, %s84
      %p96 = scmp.eq.s32.totalorder %s27, 1
      %p97 = por %p95, %p96
      %p99 = scmp.ne.s32.totalorder %s84, %s98
      %p100 = scmp.eq.s32.totalorder %s27, 0
      %p101 = por %p99, %p100
      %s103 = sadd.s32 %s102, 1
      %p106 = scmp.eq.s32.totalorder %s21, 1
      %p107 = scmp.ne.s32.totalorder %s102, %s104
      %p108 = scmp.eq.s32.totalorder %s21, 0
      %p109 = por %p107, %p108
      %p110 = scmp.ne.s32.totalorder %s102, %s104
      %p111 = scmp.eq.s32.totalorder %s26, 1
      %p112 = por %p110, %p111
      %p113 = scmp.ne.s32.totalorder %s104, %s105
      %p114 = scmp.eq.s32.totalorder %s26, 0
      %p115 = por %p113, %p114
      %p116 = scmp.ne.s32.totalorder %s104, %s105
      %p117 = scmp.eq.s32.totalorder %s27, 1
      %p118 = por %p116, %p117
      %p120 = scmp.ne.s32.totalorder %s105, %s119
      %p121 = scmp.eq.s32.totalorder %s27, 0
      %p122 = por %p120, %p121
      %s124 = sadd.s32 %s123, 1
      %p127 = scmp.eq.s32.totalorder %s21, 1
      %p128 = scmp.ne.s32.totalorder %s123, %s125
      %p129 = scmp.eq.s32.totalorder %s21, 0
      %p130 = por %p128, %p129
      %p131 = scmp.ne.s32.totalorder %s123, %s125
      %p132 = scmp.eq.s32.totalorder %s26, 1
      %p133 = por %p131, %p132
      %p134 = scmp.ne.s32.totalorder %s125, %s126
      %p135 = scmp.eq.s32.totalorder %s26, 0
      %p136 = por %p134, %p135
      %p137 = scmp.ne.s32.totalorder %s125, %s126
      %p138 = scmp.eq.s32.totalorder %s27, 1
      %p139 = por %p137, %p138
      %p141 = scmp.ne.s32.totalorder %s126, %s140
      %p142 = scmp.eq.s32.totalorder %s27, 0
      %p143 = por %p141, %p142
      %s144 = ssub.s32 %s21, %s28
      %p145 = scmp.eq.s32.totalorder %s144, 0
      %s147 = sadd.s32 %s146, 1
      %s148 = scalar_select %p145, %s146, %s147
      %p151 = pneg %p145
      %p152 = scmp.eq.s32.totalorder %s21, 1
      %p153 = por %p151, %p152
      %p154 = scmp.ne.s32.totalorder %s146, %s149
      %p155 = scmp.eq.s32.totalorder %s21, 0
      %p156 = por %p154, %p155
      %p157 = scmp.ne.s32.totalorder %s146, %s149
      %p158 = scmp.eq.s32.totalorder %s26, 1
      %p159 = por %p157, %p158
      %p160 = scmp.ne.s32.totalorder %s149, %s150
      %p161 = scmp.eq.s32.totalorder %s26, 0
      %p162 = por %p160, %p161
      %p163 = scmp.ne.s32.totalorder %s149, %s150
      %p164 = scmp.eq.s32.totalorder %s27, 1
      %p165 = por %p163, %p164
      %p167 = scmp.ne.s32.totalorder %s150, %s166
      %p168 = scmp.eq.s32.totalorder %s27, 0
      %p169 = por %p167, %p168
      %p170 = scmp.le.s32.totalorder 1, %s21
      %p171 = scmp.lt.s32.totalorder %s21, 3
      %p172 = pnand %p170, %p171
      %p173 = pneg %p172
      // Predicated region
      $region9: #{tpu_custom_call.1} parent=5 // pred_check
        _
      $region10: #{tpu_custom_call.1} parent=5 // pred_check_branch
        %175 = sbr.rel (%p172) target = $region12
      $region11: #{tpu_custom_call.1} parent=5 // pred_region
        %s176 = ssub.s32 %s21, 1
        // Predicated region
        $region13: #{tpu_custom_call.1} parent=11 // pred_check
          %p177 = pneg %p94
        $region14: #{tpu_custom_call.1} parent=11 // pred_check_branch
          %179 = sbr.rel (%p177) target = $region16
        $region15: #{tpu_custom_call.1} parent=11 // pred_region
          %s181 = ssub.s32 512, 512
          %182 = vsyncadd [#allocation6], %s181
          %s183 = sshll.u32 [#allocation7], 4
          %s184 = int_to_ptr.vmem [resolvable:$true] %s183
          %189 = dma.hbm_to_vmem [thread:$0]  %s2, 512, %s184, [#allocation6], 128, 128, 8
        $region16: #{tpu_custom_call.1} parent=11 // pred_fallthru
          _
        // Predicated region
        $region17: #{tpu_custom_call.1} parent=11 // pred_check
          %p190 = pneg %p115
        $region18: #{tpu_custom_call.1} parent=11 // pred_check_branch
          %192 = sbr.rel (%p190) target = $region20
        $region19: #{tpu_custom_call.1} parent=11 // pred_region
          %s194 = ssub.s32 384, 384
          %195 = vsyncadd [#allocation9], %s194
          %s196 = sshll.u32 [#allocation8], 4
          %s197 = int_to_ptr.vmem [resolvable:$true] %s196
          %202 = dma.hbm_to_vmem [thread:$0]  %s3, 384, %s197, [#allocation9], 128, 128, 8
        $region20: #{tpu_custom_call.1} parent=11 // pred_fallthru
          _
        // Predicated region
        $region21: #{tpu_custom_call.1} parent=11 // pred_check
          %p203 = pneg %p136
        $region22: #{tpu_custom_call.1} parent=11 // pred_check_branch
          %205 = sbr.rel (%p203) target = $region24
        $region23: #{tpu_custom_call.1} parent=11 // pred_region
          %s207 = ssub.s32 1024, 1024
          %208 = vsyncadd [#allocation9], %s207
          %s209 = sshll.u32 [#allocation10], 4
          %s210 = int_to_ptr.vmem [resolvable:$true] %s209
          %215 = dma.hbm_to_vmem [thread:$0]  %s4, 1024, %s210, [#allocation9], 128, 128, 8
        $region24: #{tpu_custom_call.1} parent=11 // pred_fallthru
          _
      $region12: #{tpu_custom_call.1} parent=5 // pred_fallthru
        _
      %p216 = scmp.lt.s32.totalorder %s21, 2
      // Predicated region
      $region25: #{tpu_custom_call.1} parent=5 // pred_check
        %p217 = pneg %p216
      $region26: #{tpu_custom_call.1} parent=5 // pred_check_branch
        %219 = sbr.rel (%p217) target = $region28
      $region27: #{tpu_custom_call.1} parent=5 // pred_region
        // Predicated region
        $region29: #{tpu_custom_call.1} parent=27 // pred_check
          %p220 = pneg %p41
        $region30: #{tpu_custom_call.1} parent=27 // pred_check_branch
          %222 = sbr.rel (%p220) target = $region32
        $region31: #{tpu_custom_call.1} parent=27 // pred_region
          %s223 = sand.u32 %s31, 1
          %s224 = scalar_lea.sflag [#allocation3], %s223
          %s225 = sand.u32 %s31, 1
          %s226 = smul.addr %s225, 16
          %s227 = scalar_lea.vmem [#allocation2], %s226
          %s229 = ssub.s32 256, 256
          %230 = vsyncadd %s224, %s229
          %s231 = smul.addr %s21, 2
          %s232 = smul.addr %s231, 128
          %s233 = scalar_lea.hbm %s0, %s232
          %s234 = sshll.u32 %s227, 4
          %s235 = int_to_ptr.vmem [resolvable:$true] %s234
          %240 = dma.hbm_to_vmem [thread:$0]  %s233, 256, %s235, %s224, 128, 128, 8
        $region32: #{tpu_custom_call.1} parent=27 // pred_fallthru
          _
        // Predicated region
        $region33: #{tpu_custom_call.1} parent=27 // pred_check
          %p241 = pneg %p67
        $region34: #{tpu_custom_call.1} parent=27 // pred_check_branch
          %243 = sbr.rel (%p241) target = $region36
        $region35: #{tpu_custom_call.1} parent=27 // pred_region
          %s244 = sand.u32 %s21, 1
          %s245 = scalar_lea.sflag [#allocation6], %s244
          %s246 = sand.u32 %s57, 1
          %s247 = smul.addr %s246, 8
          %s248 = scalar_lea.vmem [#allocation5], %s247
          %s250 = ssub.s32 128, 128
          %251 = vsyncadd %s245, %s250
          %s252 = smul.addr %s21, 128
          %s253 = scalar_lea.hbm %s1, %s252
          %s255 = sshll.u32 %s248, 4
          %s256 = int_to_ptr.vmem [resolvable:$true] %s255
          %258 = dma.hbm_to_vmem [thread:$0]  %s253, 128, %s256, %s245
        $region36: #{tpu_custom_call.1} parent=27 // pred_fallthru
          _
      $region28: #{tpu_custom_call.1} parent=5 // pred_fallthru
        _
      %p259 = scmp.le.s32.totalorder 1, %s21
      %p260 = scmp.lt.s32.totalorder %s21, 3
      %p261 = pnand %p259, %p260
      %p262 = pneg %p261
      // Predicated region
      $region37: #{tpu_custom_call.1} parent=5 // pred_check
        _
      $region38: #{tpu_custom_call.1} parent=5 // pred_check_branch
        %264 = sbr.rel (%p261) target = $region40
      $region39: #{tpu_custom_call.1} parent=5 // pred_region
        %s265 = ssub.s32 %s21, 1
        %s266 = sand.u32 %s34, 1
        %s267 = scalar_lea.sflag [#allocation3], %s266
        %s268 = sand.u32 %s34, 1
        %s269 = smul.addr %s268, 16
        %s270 = scalar_lea.vmem [#allocation2], %s269
        // Predicated region
        $region41: #{tpu_custom_call.1} parent=39 // pred_check
          %p271 = pneg %p47
        $region42: #{tpu_custom_call.1} parent=39 // pred_check_branch
          %273 = sbr.rel (%p271) target = $region44
        $region43: #{tpu_custom_call.1} parent=39 // pred_region
          %274 = dma.done %s267, 256
        $region44: #{tpu_custom_call.1} parent=39 // pred_fallthru
          _
        %s275 = sand.u32 %s26, 1
        %s276 = scalar_lea.sflag [#allocation6], %s275
        %s277 = sand.u32 %s60, 1
        %s278 = smul.addr %s277, 8
        %s279 = scalar_lea.vmem [#allocation5], %s278
        // Predicated region
        $region45: #{tpu_custom_call.1} parent=39 // pred_check
          %p280 = pneg %p73
        $region46: #{tpu_custom_call.1} parent=39 // pred_check_branch
          %282 = sbr.rel (%p280) target = $region48
        $region47: #{tpu_custom_call.1} parent=39 // pred_region
          %283 = dma.done %s276, 128
        $region48: #{tpu_custom_call.1} parent=39 // pred_fallthru
          _
        // Predicated region
        $region49: #{tpu_custom_call.1} parent=39 // pred_check
          %p284 = pneg %p94
        $region50: #{tpu_custom_call.1} parent=39 // pred_check_branch
          %286 = sbr.rel (%p284) target = $region52
        $region51: #{tpu_custom_call.1} parent=39 // pred_region
          %287 = dma.done [#allocation6], 512
        $region52: #{tpu_custom_call.1} parent=39 // pred_fallthru
          _
        // Predicated region
        $region53: #{tpu_custom_call.1} parent=39 // pred_check
          %p288 = pneg %p115
        $region54: #{tpu_custom_call.1} parent=39 // pred_check_branch
          %290 = sbr.rel (%p288) target = $region56
        $region55: #{tpu_custom_call.1} parent=39 // pred_region
          %291 = dma.done [#allocation9], 384
        $region56: #{tpu_custom_call.1} parent=39 // pred_fallthru
          _
        // Predicated region
        $region57: #{tpu_custom_call.1} parent=39 // pred_check
          %p292 = pneg %p136
        $region58: #{tpu_custom_call.1} parent=39 // pred_check_branch
          %294 = sbr.rel (%p292) target = $region60
        $region59: #{tpu_custom_call.1} parent=39 // pred_region
          %295 = dma.done [#allocation9], 1024
        $region60: #{tpu_custom_call.1} parent=39 // pred_fallthru
          _
        %s296 = sand.u32 %s34, 1
        %s297 = scalar_lea.sflag [#allocation3], %s296
        %s298 = sand.u32 %s34, 1
        %s299 = smul.addr %s298, 16
        %s300 = scalar_lea.vmem [#allocation2], %s299
        %p301 = pneg %p47
        %p302 = pneg %p44
        %s303 = sand.u32 %s26, 1
        %s304 = scalar_lea.sflag [#allocation6], %s303
        %s305 = sand.u32 %s60, 1
        %s306 = smul.addr %s305, 8
        %s307 = scalar_lea.vmem [#allocation5], %s306
        %p308 = pneg %p73
        %p309 = pneg %p70
        %p310 = pneg %p94
        %p311 = pneg %p91
        %p312 = pneg %p115
        %p313 = pneg %p112
        %p314 = pneg %p136
        %p315 = pneg %p133
        %p316 = pneg %p162
        %p317 = pneg %p159
        %s318 = sand.u32 %s149, 1
        %s319 = scalar_lea.sflag [#allocation4], %s318
        %s320 = sand.u32 %s149, 1
        %s321 = smul.addr %s320, 16
        %s322 = scalar_lea.vmem [#allocation11], %s321
        %v323 = vld [vmem:[%s270] sm:$0xff]
        %v324 = vld [vmem:[%s270 + $0x8] sm:$0xff]
        %v325 = vld [vmem:[%s279] sm:$0xff]
        %v326 = vld [vmem:[#allocation7] sm:$0xff]
        %v327 = vld [vmem:[#allocation7 + $0x8] sm:$0xff]
        %v328 = vld [vmem:[#allocation7 + $0x10] sm:$0xff]
        %v329 = vld [vmem:[#allocation7 + $0x18] sm:$0xff]
        %vm330 = vcmask 261120
        %v332 = vsel %vm330, %v323, 0
        %v335 = vsel %vm330, %v324, 0
        %337 = vmatprep.subr.mxu0 0.0
        %338 = vmatpush1.msra.mxu0 0.0
        %339 = vmatprep.subr.mxu0 0.0
        %340 = vmatpush1.msra.mxu0 0.0
        %341 = vmatprep.subr.mxu0 0.0
        %342 = vmatpush1.msra.mxu0 0.0
        %343 = vmatprep.subr.mxu0 0.0
        %344 = vmatpush1.msra.mxu0 0.0
        %345 = vmatprep.subr.mxu0 0.0
        %346 = vmatpush1.msra.mxu0 0.0
        %347 = vmatprep.subr.mxu0 0.0
        %348 = vmatpush1.msra.mxu0 0.0
        %349 = vmatprep.subr.mxu0 0.0
        %350 = vmatpush1.msra.mxu0 0.0
        %351 = vmatprep.subr.mxu0 0.0
        %352 = vmatpush1.msra.mxu0 0.0
        %353 = vmatprep.subr.mxu0 0.0
        %354 = vmatpush1.msra.mxu0 0.0
        %355 = vmatprep.subr.mxu0 0.0
        %356 = vmatpush1.msra.mxu0 0.0
        %357 = vmatprep.subr.mxu0 0.0
        %358 = vmatpush1.msra.mxu0 0.0
        %359 = vmatprep.subr.mxu0 0.0
        %360 = vmatpush1.msra.mxu0 0.0
        %361 = vmatprep.subr.mxu0 0.0
        %362 = vmatpush1.msra.mxu0 %v329
        %363 = vmatprep.subr.mxu0 0.0
        %364 = vmatpush1.msra.mxu0 %v328
        %365 = vmatprep.subr.mxu0 0.0
        %366 = vmatpush1.msra.mxu0 %v327
        %367 = vmatprep.subr.mxu0 0.0
        %368 = vmatpush1.msra.mxu0 %v326
        %369 = vmatprep.subr.mxu0 0.0
        %370 = vmatpush2.msra.mxu0 0.0
        %371 = vmatprep.subr.mxu0 0.0
        %372 = vmatpush2.msra.mxu0 0.0
        %373 = vmatprep.subr.mxu0 0.0
        %374 = vmatpush2.msra.mxu0 0.0
        %375 = vmatprep.subr.mxu0 0.0
        %376 = vmatpush2.msra.mxu0 0.0
        %377 = vmatprep.subr.mxu0 0.0
        %378 = vmatpush2.msra.mxu0 0.0
        %379 = vmatprep.subr.mxu0 0.0
        %380 = vmatpush2.msra.mxu0 0.0
        %381 = vmatprep.subr.mxu0 0.0
        %382 = vmatpush2.msra.mxu0 0.0
        %383 = vmatprep.subr.mxu0 0.0
        %384 = vmatpush2.msra.mxu0 0.0
        %385 = vmatprep.subr.mxu0 0.0
        %386 = vmatpush2.msra.mxu0 0.0
        %387 = vmatprep.subr.mxu0 0.0
        %388 = vmatpush2.msra.mxu0 0.0
        %389 = vmatprep.subr.mxu0 0.0
        %390 = vmatpush2.msra.mxu0 0.0
        %391 = vmatprep.subr.mxu0 0.0
        %392 = vmatpush2.msra.mxu0 0.0
        %393 = vmatprep.subr.mxu0 0.0
        %394 = vmatpush2.msra.mxu0 0.0
        %395 = vmatprep.subr.mxu0 0.0
        %396 = vmatpush2.msra.mxu0 0.0
        %397 = vmatprep.subr.mxu0 0.0
        %398 = vmatpush2.msra.mxu0 0.0
        %399 = vmatprep.subr.mxu0 0.0
        %400 = vmatpush2.msra.mxu0 0.0
        %401 = vmatprep.mubr.f32.mxu0 0.0
        %402 = vmatmul.mubr.f32.gmra.mxu0 %v332
        %v403 = vpop.f32.mrf.mxu0
        %v404 = vadd.f32 0.0, %v403
        %v405 = vpop.f32.mrf.mxu0
        %406 = vmatprep.mubr.f32.mxu0 0.0
        %407 = vmatmul.mubr.f32.gmra.mxu0 %v335
        %v408 = vpop.f32.mrf.mxu0
        %v409 = vadd.f32 0.0, %v408
        %v410 = vpop.f32.mrf.mxu0
        %411 = vdwg.mxu0
        %v412 = vld [vmem:[#allocation8] sm:$0xff]
        %v413 = vld [vmem:[#allocation8 + $0x8] sm:$0xff]
        %v414 = vld [vmem:[#allocation8 + $0x10] sm:$0xff]
        %vm415 = vcmask 195584
        %v417 = vsel %vm415, %v325, 0
        %419 = vmatprep.subr.mxu0 0.0
        %420 = vmatpush1.msra.mxu0 0.0
        %421 = vmatprep.subr.mxu0 0.0
        %422 = vmatpush1.msra.mxu0 0.0
        %423 = vmatprep.subr.mxu0 0.0
        %424 = vmatpush1.msra.mxu0 0.0
        %425 = vmatprep.subr.mxu0 0.0
        %426 = vmatpush1.msra.mxu0 0.0
        %427 = vmatprep.subr.mxu0 0.0
        %428 = vmatpush1.msra.mxu0 0.0
        %429 = vmatprep.subr.mxu0 0.0
        %430 = vmatpush1.msra.mxu0 0.0
        %431 = vmatprep.subr.mxu0 0.0
        %432 = vmatpush1.msra.mxu0 0.0
        %433 = vmatprep.subr.mxu0 0.0
        %434 = vmatpush1.msra.mxu0 0.0
        %435 = vmatprep.subr.mxu0 0.0
        %436 = vmatpush1.msra.mxu0 0.0
        %437 = vmatprep.subr.mxu0 0.0
        %438 = vmatpush1.msra.mxu0 0.0
        %439 = vmatprep.subr.mxu0 0.0
        %440 = vmatpush1.msra.mxu0 0.0
        %441 = vmatprep.subr.mxu0 0.0
        %442 = vmatpush1.msra.mxu0 0.0
        %443 = vmatprep.subr.mxu0 0.0
        %444 = vmatpush1.msra.mxu0 0.0
        %445 = vmatprep.subr.mxu0 0.0
        %446 = vmatpush1.msra.mxu0 %v414
        %447 = vmatprep.subr.mxu0 0.0
        %448 = vmatpush1.msra.mxu0 %v413
        %449 = vmatprep.subr.mxu0 0.0
        %450 = vmatpush1.msra.mxu0 %v412
        %451 = vmatprep.subr.mxu0 0.0
        %452 = vmatpush2.msra.mxu0 0.0
        %453 = vmatprep.subr.mxu0 0.0
        %454 = vmatpush2.msra.mxu0 0.0
        %455 = vmatprep.subr.mxu0 0.0
        %456 = vmatpush2.msra.mxu0 0.0
        %457 = vmatprep.subr.mxu0 0.0
        %458 = vmatpush2.msra.mxu0 0.0
        %459 = vmatprep.subr.mxu0 0.0
        %460 = vmatpush2.msra.mxu0 0.0
        %461 = vmatprep.subr.mxu0 0.0
        %462 = vmatpush2.msra.mxu0 0.0
        %463 = vmatprep.subr.mxu0 0.0
        %464 = vmatpush2.msra.mxu0 0.0
        %465 = vmatprep.subr.mxu0 0.0
        %466 = vmatpush2.msra.mxu0 0.0
        %467 = vmatprep.subr.mxu0 0.0
        %468 = vmatpush2.msra.mxu0 0.0
        %469 = vmatprep.subr.mxu0 0.0
        %470 = vmatpush2.msra.mxu0 0.0
        %471 = vmatprep.subr.mxu0 0.0
        %472 = vmatpush2.msra.mxu0 0.0
        %473 = vmatprep.subr.mxu0 0.0
        %474 = vmatpush2.msra.mxu0 0.0
        %475 = vmatprep.subr.mxu0 0.0
        %476 = vmatpush2.msra.mxu0 0.0
        %477 = vmatprep.subr.mxu0 0.0
        %478 = vmatpush2.msra.mxu0 0.0
        %479 = vmatprep.subr.mxu0 0.0
        %480 = vmatpush2.msra.mxu0 0.0
        %481 = vmatprep.subr.mxu0 0.0
        %482 = vmatpush2.msra.mxu0 0.0
        %483 = vmatprep.mubr.f32.mxu0 0.0
        %484 = vmatmul.mubr.f32.gmra.mxu0 %v417
        %v485 = vpop.f32.mrf.mxu0
        %v486 = vadd.f32 0.0, %v485
        %v487 = vpop.f32.mrf.mxu0
        %488 = vdwg.mxu0
        %v489 = vmul.f32 %v404, 0.25
        %v490 = vmul.f32 %v409, 0.25
        %vm491 = vcmask 130048
        %v493 = vsel %vm491, %v489, 0
        %v496 = vsel %vm491, %v490, 0
        %v499 = vsel %vm491, %v486, 0
        %501 = vmatprep.subr.mxu0 0.0
        %502 = vmatpush1.xpose.msra.mxu0 0.0
        %503 = vmatprep.subr.mxu0 0.0
        %504 = vmatpush1.xpose.msra.mxu0 0.0
        %505 = vmatprep.subr.mxu0 0.0
        %506 = vmatpush1.xpose.msra.mxu0 0.0
        %507 = vmatprep.subr.mxu0 0.0
        %508 = vmatpush1.xpose.msra.mxu0 0.0
        %509 = vmatprep.subr.mxu0 0.0
        %510 = vmatpush1.xpose.msra.mxu0 0.0
        %511 = vmatprep.subr.mxu0 0.0
        %512 = vmatpush1.xpose.msra.mxu0 0.0
        %513 = vmatprep.subr.mxu0 0.0
        %514 = vmatpush1.xpose.msra.mxu0 0.0
        %515 = vmatprep.subr.mxu0 0.0
        %516 = vmatpush1.xpose.msra.mxu0 0.0
        %517 = vmatprep.subr.mxu0 0.0
        %518 = vmatpush1.xpose.msra.mxu0 0.0
        %519 = vmatprep.subr.mxu0 0.0
        %520 = vmatpush1.xpose.msra.mxu0 0.0
        %521 = vmatprep.subr.mxu0 0.0
        %522 = vmatpush1.xpose.msra.mxu0 0.0
        %523 = vmatprep.subr.mxu0 0.0
        %524 = vmatpush1.xpose.msra.mxu0 0.0
        %525 = vmatprep.subr.mxu0 0.0
        %526 = vmatpush1.xpose.msra.mxu0 0.0
        %527 = vmatprep.subr.mxu0 0.0
        %528 = vmatpush1.xpose.msra.mxu0 0.0
        %529 = vmatprep.subr.mxu0 0.0
        %530 = vmatpush1.xpose.msra.mxu0 0.0
        %531 = vmatprep.subr.mxu0 0.0
        %532 = vmatpush1.xpose.msra.mxu0 %v499
        %533 = vmatprep.subr.mxu0 0.0
        %534 = vmatpush2.xpose.msra.mxu0 0.0
        %535 = vmatprep.subr.mxu0 0.0
        %536 = vmatpush2.xpose.msra.mxu0 0.0
        %537 = vmatprep.subr.mxu0 0.0
        %538 = vmatpush2.xpose.msra.mxu0 0.0
        %539 = vmatprep.subr.mxu0 0.0
        %540 = vmatpush2.xpose.msra.mxu0 0.0
        %541 = vmatprep.subr.mxu0 0.0
        %542 = vmatpush2.xpose.msra.mxu0 0.0
        %543 = vmatprep.subr.mxu0 0.0
        %544 = vmatpush2.xpose.msra.mxu0 0.0
        %545 = vmatprep.subr.mxu0 0.0
        %546 = vmatpush2.xpose.msra.mxu0 0.0
        %547 = vmatprep.subr.mxu0 0.0
        %548 = vmatpush2.xpose.msra.mxu0 0.0
        %549 = vmatprep.subr.mxu0 0.0
        %550 = vmatpush2.xpose.msra.mxu0 0.0
        %551 = vmatprep.subr.mxu0 0.0
        %552 = vmatpush2.xpose.msra.mxu0 0.0
        %553 = vmatprep.subr.mxu0 0.0
        %554 = vmatpush2.xpose.msra.mxu0 0.0
        %555 = vmatprep.subr.mxu0 0.0
        %556 = vmatpush2.xpose.msra.mxu0 0.0
        %557 = vmatprep.subr.mxu0 0.0
        %558 = vmatpush2.xpose.msra.mxu0 0.0
        %559 = vmatprep.subr.mxu0 0.0
        %560 = vmatpush2.xpose.msra.mxu0 0.0
        %561 = vmatprep.subr.mxu0 0.0
        %562 = vmatpush2.xpose.msra.mxu0 0.0
        %563 = vmatprep.subr.mxu0 0.0
        %564 = vmatpush2.xpose.msra.mxu0 0.0
        %565 = vmatprep.mubr.f32.mxu0 0.0
        %566 = vmatmul.mubr.f32.gmra.mxu0 %v493
        %v567 = vpop.f32.mrf.mxu0
        %v568 = vadd.f32 0.0, %v567
        %v569 = vpop.f32.mrf.mxu0
        %570 = vmatprep.mubr.f32.mxu0 0.0
        %571 = vmatmul.mubr.f32.gmra.mxu0 %v496
        %v572 = vpop.f32.mrf.mxu0
        %v573 = vadd.f32 0.0, %v572
        %v574 = vpop.f32.mrf.mxu0
        %575 = vdwg.mxu0
        %vm576 = vcmask 64512
        %v577 = vsel %vm576, %v568, -inf
        %578 = vmax.xlane.f32.xlu0 %v577
        %v579 = vpop.xlane.xlu0 %578
        %v580 = vsel %vm576, %v573, -inf
        %581 = vmax.xlane.f32.xlu0 %v580
        %v582 = vpop.xlane.xlu0 %581
        %v583 = vsub.f32 %v568, %v579
        %v584 = vsub.f32 %v573, %v582
        %v585 = vmul.f32 %v583, 1.442695
        %v586 = vpow.pop %v585
        %v587 = vmul.f32 %v584, 1.442695
        %v588 = vpow.pop %v587
        %v589 = vsel %vm576, %v586, 0.0
        %590 = vadd.xlane.f32.xlu0 %v589
        %v591 = vpop.xlane.xlu0 %590
        %v592 = vsel %vm576, %v588, 0.0
        %593 = vadd.xlane.f32.xlu0 %v592
        %v594 = vpop.xlane.xlu0 %593
        %v595 = vrcp.pop %v591
        %v596 = vrcp.pop %v594
        %v597 = vmul.f32 %v586, %v595
        %v598 = vmul.f32 %v588, %v596
        %599 = vrot.lane.b32.xlu0 %v486, 64
        %v600 = vpop.permute.xlu0 %599
        %v603 = vsel %vm576, %v597, 0
        %v606 = vsel %vm576, %v598, 0
        %608 = vmatprep.subr.mxu0 0.0
        %609 = vmatpush1.msra.mxu0 0.0
        %610 = vmatprep.subr.mxu0 0.0
        %611 = vmatpush1.msra.mxu0 0.0
        %612 = vmatprep.subr.mxu0 0.0
        %613 = vmatpush1.msra.mxu0 0.0
        %614 = vmatprep.subr.mxu0 0.0
        %615 = vmatpush1.msra.mxu0 0.0
        %616 = vmatprep.subr.mxu0 0.0
        %617 = vmatpush1.msra.mxu0 0.0
        %618 = vmatprep.subr.mxu0 0.0
        %619 = vmatpush1.msra.mxu0 0.0
        %620 = vmatprep.subr.mxu0 0.0
        %621 = vmatpush1.msra.mxu0 0.0
        %622 = vmatprep.subr.mxu0 0.0
        %623 = vmatpush1.msra.mxu0 0.0
        %624 = vmatprep.subr.mxu0 0.0
        %625 = vmatpush1.msra.mxu0 0.0
        %626 = vmatprep.subr.mxu0 0.0
        %627 = vmatpush1.msra.mxu0 0.0
        %628 = vmatprep.subr.mxu0 0.0
        %629 = vmatpush1.msra.mxu0 0.0
        %630 = vmatprep.subr.mxu0 0.0
        %631 = vmatpush1.msra.mxu0 0.0
        %632 = vmatprep.subr.mxu0 0.0
        %633 = vmatpush1.msra.mxu0 0.0
        %634 = vmatprep.subr.mxu0 0.0
        %635 = vmatpush1.msra.mxu0 0.0
        %636 = vmatprep.subr.mxu0 0.0
        %637 = vmatpush1.msra.mxu0 0.0
        %638 = vmatprep.subr.mxu0 0.0
        %639 = vmatpush1.msra.mxu0 %v600
        %640 = vmatprep.subr.mxu0 0.0
        %641 = vmatpush2.msra.mxu0 0.0
        %642 = vmatprep.subr.mxu0 0.0
        %643 = vmatpush2.msra.mxu0 0.0
        %644 = vmatprep.subr.mxu0 0.0
        %645 = vmatpush2.msra.mxu0 0.0
        %646 = vmatprep.subr.mxu0 0.0
        %647 = vmatpush2.msra.mxu0 0.0
        %648 = vmatprep.subr.mxu0 0.0
        %649 = vmatpush2.msra.mxu0 0.0
        %650 = vmatprep.subr.mxu0 0.0
        %651 = vmatpush2.msra.mxu0 0.0
        %652 = vmatprep.subr.mxu0 0.0
        %653 = vmatpush2.msra.mxu0 0.0
        %654 = vmatprep.subr.mxu0 0.0
        %655 = vmatpush2.msra.mxu0 0.0
        %656 = vmatprep.subr.mxu0 0.0
        %657 = vmatpush2.msra.mxu0 0.0
        %658 = vmatprep.subr.mxu0 0.0
        %659 = vmatpush2.msra.mxu0 0.0
        %660 = vmatprep.subr.mxu0 0.0
        %661 = vmatpush2.msra.mxu0 0.0
        %662 = vmatprep.subr.mxu0 0.0
        %663 = vmatpush2.msra.mxu0 0.0
        %664 = vmatprep.subr.mxu0 0.0
        %665 = vmatpush2.msra.mxu0 0.0
        %666 = vmatprep.subr.mxu0 0.0
        %667 = vmatpush2.msra.mxu0 0.0
        %668 = vmatprep.subr.mxu0 0.0
        %669 = vmatpush2.msra.mxu0 0.0
        %670 = vmatprep.subr.mxu0 0.0
        %671 = vmatpush2.msra.mxu0 0.0
        %672 = vmatprep.mubr.f32.mxu0 0.0
        %673 = vmatmul.mubr.f32.gmra.mxu0 %v603
        %v674 = vpop.f32.mrf.mxu0
        %v675 = vadd.f32 0.0, %v674
        %v676 = vpop.f32.mrf.mxu0
        %677 = vmatprep.mubr.f32.mxu0 0.0
        %678 = vmatmul.mubr.f32.gmra.mxu0 %v606
        %v679 = vpop.f32.mrf.mxu0
        %v680 = vadd.f32 0.0, %v679
        %v681 = vpop.f32.mrf.mxu0
        %682 = vdwg.mxu0
        %683 = vrot.lane.b32.xlu0 %v489, 112
        %v684 = vpop.permute.xlu0 %683
        %685 = vrot.lane.b32.xlu0 %v490, 112
        %v686 = vpop.permute.xlu0 %685
        %687 = vrot.lane.b32.xlu0 %v486, 112
        %v688 = vpop.permute.xlu0 %687
        %v689 = vsel %vm491, %v684, 0
        %v691 = vsel %vm491, %v686, 0
        %v693 = vsel %vm491, %v688, 0
        %695 = vmatprep.subr.mxu0 0.0
        %696 = vmatpush1.xpose.msra.mxu0 0.0
        %697 = vmatprep.subr.mxu0 0.0
        %698 = vmatpush1.xpose.msra.mxu0 0.0
        %699 = vmatprep.subr.mxu0 0.0
        %700 = vmatpush1.xpose.msra.mxu0 0.0
        %701 = vmatprep.subr.mxu0 0.0
        %702 = vmatpush1.xpose.msra.mxu0 0.0
        %703 = vmatprep.subr.mxu0 0.0
        %704 = vmatpush1.xpose.msra.mxu0 0.0
        %705 = vmatprep.subr.mxu0 0.0
        %706 = vmatpush1.xpose.msra.mxu0 0.0
        %707 = vmatprep.subr.mxu0 0.0
        %708 = vmatpush1.xpose.msra.mxu0 0.0
        %709 = vmatprep.subr.mxu0 0.0
        %710 = vmatpush1.xpose.msra.mxu0 0.0
        %711 = vmatprep.subr.mxu0 0.0
        %712 = vmatpush1.xpose.msra.mxu0 0.0
        %713 = vmatprep.subr.mxu0 0.0
        %714 = vmatpush1.xpose.msra.mxu0 0.0
        %715 = vmatprep.subr.mxu0 0.0
        %716 = vmatpush1.xpose.msra.mxu0 0.0
        %717 = vmatprep.subr.mxu0 0.0
        %718 = vmatpush1.xpose.msra.mxu0 0.0
        %719 = vmatprep.subr.mxu0 0.0
        %720 = vmatpush1.xpose.msra.mxu0 0.0
        %721 = vmatprep.subr.mxu0 0.0
        %722 = vmatpush1.xpose.msra.mxu0 0.0
        %723 = vmatprep.subr.mxu0 0.0
        %724 = vmatpush1.xpose.msra.mxu0 0.0
        %725 = vmatprep.subr.mxu0 0.0
        %726 = vmatpush1.xpose.msra.mxu0 %v693
        %727 = vmatprep.subr.mxu0 0.0
        %728 = vmatpush2.xpose.msra.mxu0 0.0
        %729 = vmatprep.subr.mxu0 0.0
        %730 = vmatpush2.xpose.msra.mxu0 0.0
        %731 = vmatprep.subr.mxu0 0.0
        %732 = vmatpush2.xpose.msra.mxu0 0.0
        %733 = vmatprep.subr.mxu0 0.0
        %734 = vmatpush2.xpose.msra.mxu0 0.0
        %735 = vmatprep.subr.mxu0 0.0
        %736 = vmatpush2.xpose.msra.mxu0 0.0
        %737 = vmatprep.subr.mxu0 0.0
        %738 = vmatpush2.xpose.msra.mxu0 0.0
        %739 = vmatprep.subr.mxu0 0.0
        %740 = vmatpush2.xpose.msra.mxu0 0.0
        %741 = vmatprep.subr.mxu0 0.0
        %742 = vmatpush2.xpose.msra.mxu0 0.0
        %743 = vmatprep.subr.mxu0 0.0
        %744 = vmatpush2.xpose.msra.mxu0 0.0
        %745 = vmatprep.subr.mxu0 0.0
        %746 = vmatpush2.xpose.msra.mxu0 0.0
        %747 = vmatprep.subr.mxu0 0.0
        %748 = vmatpush2.xpose.msra.mxu0 0.0
        %749 = vmatprep.subr.mxu0 0.0
        %750 = vmatpush2.xpose.msra.mxu0 0.0
        %751 = vmatprep.subr.mxu0 0.0
        %752 = vmatpush2.xpose.msra.mxu0 0.0
        %753 = vmatprep.subr.mxu0 0.0
        %754 = vmatpush2.xpose.msra.mxu0 0.0
        %755 = vmatprep.subr.mxu0 0.0
        %756 = vmatpush2.xpose.msra.mxu0 0.0
        %757 = vmatprep.subr.mxu0 0.0
        %758 = vmatpush2.xpose.msra.mxu0 0.0
        %759 = vmatprep.mubr.f32.mxu0 0.0
        %760 = vmatmul.mubr.f32.gmra.mxu0 %v689
        %v761 = vpop.f32.mrf.mxu0
        %v762 = vadd.f32 0.0, %v761
        %v763 = vpop.f32.mrf.mxu0
        %764 = vmatprep.mubr.f32.mxu0 0.0
        %765 = vmatmul.mubr.f32.gmra.mxu0 %v691
        %v766 = vpop.f32.mrf.mxu0
        %v767 = vadd.f32 0.0, %v766
        %v768 = vpop.f32.mrf.mxu0
        %769 = vdwg.mxu0
        %v770 = vsel %vm576, %v762, -inf
        %771 = vmax.xlane.f32.xlu0 %v770
        %v772 = vpop.xlane.xlu0 %771
        %v773 = vsel %vm576, %v767, -inf
        %774 = vmax.xlane.f32.xlu0 %v773
        %v775 = vpop.xlane.xlu0 %774
        %v776 = vsub.f32 %v762, %v772
        %v777 = vsub.f32 %v767, %v775
        %v778 = vmul.f32 %v776, 1.442695
        %v779 = vpow.pop %v778
        %v780 = vmul.f32 %v777, 1.442695
        %v781 = vpow.pop %v780
        %v782 = vsel %vm576, %v779, 0.0
        %783 = vadd.xlane.f32.xlu0 %v782
        %v784 = vpop.xlane.xlu0 %783
        %v785 = vsel %vm576, %v781, 0.0
        %786 = vadd.xlane.f32.xlu0 %v785
        %v787 = vpop.xlane.xlu0 %786
        %v788 = vrcp.pop %v784
        %v789 = vrcp.pop %v787
        %v790 = vmul.f32 %v779, %v788
        %v791 = vmul.f32 %v781, %v789
        %792 = vrot.lane.b32.xlu0 %v486, 48
        %v793 = vpop.permute.xlu0 %792
        %v796 = vsel %vm576, %v790, 0
        %v799 = vsel %vm576, %v791, 0
        %801 = vmatprep.subr.mxu0 0.0
        %802 = vmatpush1.msra.mxu0 0.0
        %803 = vmatprep.subr.mxu0 0.0
        %804 = vmatpush1.msra.mxu0 0.0
        %805 = vmatprep.subr.mxu0 0.0
        %806 = vmatpush1.msra.mxu0 0.0
        %807 = vmatprep.subr.mxu0 0.0
        %808 = vmatpush1.msra.mxu0 0.0
        %809 = vmatprep.subr.mxu0 0.0
        %810 = vmatpush1.msra.mxu0 0.0
        %811 = vmatprep.subr.mxu0 0.0
        %812 = vmatpush1.msra.mxu0 0.0
        %813 = vmatprep.subr.mxu0 0.0
        %814 = vmatpush1.msra.mxu0 0.0
        %815 = vmatprep.subr.mxu0 0.0
        %816 = vmatpush1.msra.mxu0 0.0
        %817 = vmatprep.subr.mxu0 0.0
        %818 = vmatpush1.msra.mxu0 0.0
        %819 = vmatprep.subr.mxu0 0.0
        %820 = vmatpush1.msra.mxu0 0.0
        %821 = vmatprep.subr.mxu0 0.0
        %822 = vmatpush1.msra.mxu0 0.0
        %823 = vmatprep.subr.mxu0 0.0
        %824 = vmatpush1.msra.mxu0 0.0
        %825 = vmatprep.subr.mxu0 0.0
        %826 = vmatpush1.msra.mxu0 0.0
        %827 = vmatprep.subr.mxu0 0.0
        %828 = vmatpush1.msra.mxu0 0.0
        %829 = vmatprep.subr.mxu0 0.0
        %830 = vmatpush1.msra.mxu0 0.0
        %831 = vmatprep.subr.mxu0 0.0
        %832 = vmatpush1.msra.mxu0 %v793
        %833 = vmatprep.subr.mxu0 0.0
        %834 = vmatpush2.msra.mxu0 0.0
        %835 = vmatprep.subr.mxu0 0.0
        %836 = vmatpush2.msra.mxu0 0.0
        %837 = vmatprep.subr.mxu0 0.0
        %838 = vmatpush2.msra.mxu0 0.0
        %839 = vmatprep.subr.mxu0 0.0
        %840 = vmatpush2.msra.mxu0 0.0
        %841 = vmatprep.subr.mxu0 0.0
        %842 = vmatpush2.msra.mxu0 0.0
        %843 = vmatprep.subr.mxu0 0.0
        %844 = vmatpush2.msra.mxu0 0.0
        %845 = vmatprep.subr.mxu0 0.0
        %846 = vmatpush2.msra.mxu0 0.0
        %847 = vmatprep.subr.mxu0 0.0
        %848 = vmatpush2.msra.mxu0 0.0
        %849 = vmatprep.subr.mxu0 0.0
        %850 = vmatpush2.msra.mxu0 0.0
        %851 = vmatprep.subr.mxu0 0.0
        %852 = vmatpush2.msra.mxu0 0.0
        %853 = vmatprep.subr.mxu0 0.0
        %854 = vmatpush2.msra.mxu0 0.0
        %855 = vmatprep.subr.mxu0 0.0
        %856 = vmatpush2.msra.mxu0 0.0
        %857 = vmatprep.subr.mxu0 0.0
        %858 = vmatpush2.msra.mxu0 0.0
        %859 = vmatprep.subr.mxu0 0.0
        %860 = vmatpush2.msra.mxu0 0.0
        %861 = vmatprep.subr.mxu0 0.0
        %862 = vmatpush2.msra.mxu0 0.0
        %863 = vmatprep.subr.mxu0 0.0
        %864 = vmatpush2.msra.mxu0 0.0
        %865 = vmatprep.mubr.f32.mxu0 0.0
        %866 = vmatmul.mubr.f32.gmra.mxu0 %v796
        %v867 = vpop.f32.mrf.mxu0
        %v868 = vadd.f32 0.0, %v867
        %v869 = vpop.f32.mrf.mxu0
        %870 = vmatprep.mubr.f32.mxu0 0.0
        %871 = vmatmul.mubr.f32.gmra.mxu0 %v799
        %v872 = vpop.f32.mrf.mxu0
        %v873 = vadd.f32 0.0, %v872
        %v874 = vpop.f32.mrf.mxu0
        %875 = vdwg.mxu0
        %876 = vrot.lane.b32.xlu0 %v489, 96
        %v877 = vpop.permute.xlu0 %876
        %878 = vrot.lane.b32.xlu0 %v490, 96
        %v879 = vpop.permute.xlu0 %878
        %880 = vrot.lane.b32.xlu0 %v486, 96
        %v881 = vpop.permute.xlu0 %880
        %v882 = vsel %vm491, %v877, 0
        %v884 = vsel %vm491, %v879, 0
        %v886 = vsel %vm491, %v881, 0
        %888 = vmatprep.subr.mxu0 0.0
        %889 = vmatpush1.xpose.msra.mxu0 0.0
        %890 = vmatprep.subr.mxu0 0.0
        %891 = vmatpush1.xpose.msra.mxu0 0.0
        %892 = vmatprep.subr.mxu0 0.0
        %893 = vmatpush1.xpose.msra.mxu0 0.0
        %894 = vmatprep.subr.mxu0 0.0
        %895 = vmatpush1.xpose.msra.mxu0 0.0
        %896 = vmatprep.subr.mxu0 0.0
        %897 = vmatpush1.xpose.msra.mxu0 0.0
        %898 = vmatprep.subr.mxu0 0.0
        %899 = vmatpush1.xpose.msra.mxu0 0.0
        %900 = vmatprep.subr.mxu0 0.0
        %901 = vmatpush1.xpose.msra.mxu0 0.0
        %902 = vmatprep.subr.mxu0 0.0
        %903 = vmatpush1.xpose.msra.mxu0 0.0
        %904 = vmatprep.subr.mxu0 0.0
        %905 = vmatpush1.xpose.msra.mxu0 0.0
        %906 = vmatprep.subr.mxu0 0.0
        %907 = vmatpush1.xpose.msra.mxu0 0.0
        %908 = vmatprep.subr.mxu0 0.0
        %909 = vmatpush1.xpose.msra.mxu0 0.0
        %910 = vmatprep.subr.mxu0 0.0
        %911 = vmatpush1.xpose.msra.mxu0 0.0
        %912 = vmatprep.subr.mxu0 0.0
        %913 = vmatpush1.xpose.msra.mxu0 0.0
        %914 = vmatprep.subr.mxu0 0.0
        %915 = vmatpush1.xpose.msra.mxu0 0.0
        %916 = vmatprep.subr.mxu0 0.0
        %917 = vmatpush1.xpose.msra.mxu0 0.0
        %918 = vmatprep.subr.mxu0 0.0
        %919 = vmatpush1.xpose.msra.mxu0 %v886
        %920 = vmatprep.subr.mxu0 0.0
        %921 = vmatpush2.xpose.msra.mxu0 0.0
        %922 = vmatprep.subr.mxu0 0.0
        %923 = vmatpush2.xpose.msra.mxu0 0.0
        %924 = vmatprep.subr.mxu0 0.0
        %925 = vmatpush2.xpose.msra.mxu0 0.0
        %926 = vmatprep.subr.mxu0 0.0
        %927 = vmatpush2.xpose.msra.mxu0 0.0
        %928 = vmatprep.subr.mxu0 0.0
        %929 = vmatpush2.xpose.msra.mxu0 0.0
        %930 = vmatprep.subr.mxu0 0.0
        %931 = vmatpush2.xpose.msra.mxu0 0.0
        %932 = vmatprep.subr.mxu0 0.0
        %933 = vmatpush2.xpose.msra.mxu0 0.0
        %934 = vmatprep.subr.mxu0 0.0
        %935 = vmatpush2.xpose.msra.mxu0 0.0
        %936 = vmatprep.subr.mxu0 0.0
        %937 = vmatpush2.xpose.msra.mxu0 0.0
        %938 = vmatprep.subr.mxu0 0.0
        %939 = vmatpush2.xpose.msra.mxu0 0.0
        %940 = vmatprep.subr.mxu0 0.0
        %941 = vmatpush2.xpose.msra.mxu0 0.0
        %942 = vmatprep.subr.mxu0 0.0
        %943 = vmatpush2.xpose.msra.mxu0 0.0
        %944 = vmatprep.subr.mxu0 0.0
        %945 = vmatpush2.xpose.msra.mxu0 0.0
        %946 = vmatprep.subr.mxu0 0.0
        %947 = vmatpush2.xpose.msra.mxu0 0.0
        %948 = vmatprep.subr.mxu0 0.0
        %949 = vmatpush2.xpose.msra.mxu0 0.0
        %950 = vmatprep.subr.mxu0 0.0
        %951 = vmatpush2.xpose.msra.mxu0 0.0
        %952 = vmatprep.mubr.f32.mxu0 0.0
        %953 = vmatmul.mubr.f32.gmra.mxu0 %v882
        %v954 = vpop.f32.mrf.mxu0
        %v955 = vadd.f32 0.0, %v954
        %v956 = vpop.f32.mrf.mxu0
        %957 = vmatprep.mubr.f32.mxu0 0.0
        %958 = vmatmul.mubr.f32.gmra.mxu0 %v884
        %v959 = vpop.f32.mrf.mxu0
        %v960 = vadd.f32 0.0, %v959
        %v961 = vpop.f32.mrf.mxu0
        %962 = vdwg.mxu0
        %v963 = vsel %vm576, %v955, -inf
        %964 = vmax.xlane.f32.xlu0 %v963
        %v965 = vpop.xlane.xlu0 %964
        %v966 = vsel %vm576, %v960, -inf
        %967 = vmax.xlane.f32.xlu0 %v966
        %v968 = vpop.xlane.xlu0 %967
        %v969 = vsub.f32 %v955, %v965
        %v970 = vsub.f32 %v960, %v968
        %v971 = vmul.f32 %v969, 1.442695
        %v972 = vpow.pop %v971
        %v973 = vmul.f32 %v970, 1.442695
        %v974 = vpow.pop %v973
        %v975 = vsel %vm576, %v972, 0.0
        %976 = vadd.xlane.f32.xlu0 %v975
        %v977 = vpop.xlane.xlu0 %976
        %v978 = vsel %vm576, %v974, 0.0
        %979 = vadd.xlane.f32.xlu0 %v978
        %v980 = vpop.xlane.xlu0 %979
        %v981 = vrcp.pop %v977
        %v982 = vrcp.pop %v980
        %v983 = vmul.f32 %v972, %v981
        %v984 = vmul.f32 %v974, %v982
        %985 = vrot.lane.b32.xlu0 %v486, 32
        %v986 = vpop.permute.xlu0 %985
        %v989 = vsel %vm576, %v983, 0
        %v992 = vsel %vm576, %v984, 0
        %994 = vmatprep.subr.mxu0 0.0
        %995 = vmatpush1.msra.mxu0 0.0
        %996 = vmatprep.subr.mxu0 0.0
        %997 = vmatpush1.msra.mxu0 0.0
        %998 = vmatprep.subr.mxu0 0.0
        %999 = vmatpush1.msra.mxu0 0.0
        %1000 = vmatprep.subr.mxu0 0.0
        %1001 = vmatpush1.msra.mxu0 0.0
        %1002 = vmatprep.subr.mxu0 0.0
        %1003 = vmatpush1.msra.mxu0 0.0
        %1004 = vmatprep.subr.mxu0 0.0
        %1005 = vmatpush1.msra.mxu0 0.0
        %1006 = vmatprep.subr.mxu0 0.0
        %1007 = vmatpush1.msra.mxu0 0.0
        %1008 = vmatprep.subr.mxu0 0.0
        %1009 = vmatpush1.msra.mxu0 0.0
        %1010 = vmatprep.subr.mxu0 0.0
        %1011 = vmatpush1.msra.mxu0 0.0
        %1012 = vmatprep.subr.mxu0 0.0
        %1013 = vmatpush1.msra.mxu0 0.0
        %1014 = vmatprep.subr.mxu0 0.0
        %1015 = vmatpush1.msra.mxu0 0.0
        %1016 = vmatprep.subr.mxu0 0.0
        %1017 = vmatpush1.msra.mxu0 0.0
        %1018 = vmatprep.subr.mxu0 0.0
        %1019 = vmatpush1.msra.mxu0 0.0
        %1020 = vmatprep.subr.mxu0 0.0
        %1021 = vmatpush1.msra.mxu0 0.0
        %1022 = vmatprep.subr.mxu0 0.0
        %1023 = vmatpush1.msra.mxu0 0.0
        %1024 = vmatprep.subr.mxu0 0.0
        %1025 = vmatpush1.msra.mxu0 %v986
        %1026 = vmatprep.subr.mxu0 0.0
        %1027 = vmatpush2.msra.mxu0 0.0
        %1028 = vmatprep.subr.mxu0 0.0
        %1029 = vmatpush2.msra.mxu0 0.0
        %1030 = vmatprep.subr.mxu0 0.0
        %1031 = vmatpush2.msra.mxu0 0.0
        %1032 = vmatprep.subr.mxu0 0.0
        %1033 = vmatpush2.msra.mxu0 0.0
        %1034 = vmatprep.subr.mxu0 0.0
        %1035 = vmatpush2.msra.mxu0 0.0
        %1036 = vmatprep.subr.mxu0 0.0
        %1037 = vmatpush2.msra.mxu0 0.0
        %1038 = vmatprep.subr.mxu0 0.0
        %1039 = vmatpush2.msra.mxu0 0.0
        %1040 = vmatprep.subr.mxu0 0.0
        %1041 = vmatpush2.msra.mxu0 0.0
        %1042 = vmatprep.subr.mxu0 0.0
        %1043 = vmatpush2.msra.mxu0 0.0
        %1044 = vmatprep.subr.mxu0 0.0
        %1045 = vmatpush2.msra.mxu0 0.0
        %1046 = vmatprep.subr.mxu0 0.0
        %1047 = vmatpush2.msra.mxu0 0.0
        %1048 = vmatprep.subr.mxu0 0.0
        %1049 = vmatpush2.msra.mxu0 0.0
        %1050 = vmatprep.subr.mxu0 0.0
        %1051 = vmatpush2.msra.mxu0 0.0
        %1052 = vmatprep.subr.mxu0 0.0
        %1053 = vmatpush2.msra.mxu0 0.0
        %1054 = vmatprep.subr.mxu0 0.0
        %1055 = vmatpush2.msra.mxu0 0.0
        %1056 = vmatprep.subr.mxu0 0.0
        %1057 = vmatpush2.msra.mxu0 0.0
        %1058 = vmatprep.mubr.f32.mxu0 0.0
        %1059 = vmatmul.mubr.f32.gmra.mxu0 %v989
        %v1060 = vpop.f32.mrf.mxu0
        %v1061 = vadd.f32 0.0, %v1060
        %v1062 = vpop.f32.mrf.mxu0
        %1063 = vmatprep.mubr.f32.mxu0 0.0
        %1064 = vmatmul.mubr.f32.gmra.mxu0 %v992
        %v1065 = vpop.f32.mrf.mxu0
        %v1066 = vadd.f32 0.0, %v1065
        %v1067 = vpop.f32.mrf.mxu0
        %1068 = vdwg.mxu0
        %1069 = vrot.lane.b32.xlu0 %v489, 80
        %v1070 = vpop.permute.xlu0 %1069
        %1071 = vrot.lane.b32.xlu0 %v490, 80
        %v1072 = vpop.permute.xlu0 %1071
        %1073 = vrot.lane.b32.xlu0 %v486, 80
        %v1074 = vpop.permute.xlu0 %1073
        %v1075 = vsel %vm491, %v1070, 0
        %v1077 = vsel %vm491, %v1072, 0
        %v1079 = vsel %vm491, %v1074, 0
        %1081 = vmatprep.subr.mxu0 0.0
        %1082 = vmatpush1.xpose.msra.mxu0 0.0
        %1083 = vmatprep.subr.mxu0 0.0
        %1084 = vmatpush1.xpose.msra.mxu0 0.0
        %1085 = vmatprep.subr.mxu0 0.0
        %1086 = vmatpush1.xpose.msra.mxu0 0.0
        %1087 = vmatprep.subr.mxu0 0.0
        %1088 = vmatpush1.xpose.msra.mxu0 0.0
        %1089 = vmatprep.subr.mxu0 0.0
        %1090 = vmatpush1.xpose.msra.mxu0 0.0
        %1091 = vmatprep.subr.mxu0 0.0
        %1092 = vmatpush1.xpose.msra.mxu0 0.0
        %1093 = vmatprep.subr.mxu0 0.0
        %1094 = vmatpush1.xpose.msra.mxu0 0.0
        %1095 = vmatprep.subr.mxu0 0.0
        %1096 = vmatpush1.xpose.msra.mxu0 0.0
        %1097 = vmatprep.subr.mxu0 0.0
        %1098 = vmatpush1.xpose.msra.mxu0 0.0
        %1099 = vmatprep.subr.mxu0 0.0
        %1100 = vmatpush1.xpose.msra.mxu0 0.0
        %1101 = vmatprep.subr.mxu0 0.0
        %1102 = vmatpush1.xpose.msra.mxu0 0.0
        %1103 = vmatprep.subr.mxu0 0.0
        %1104 = vmatpush1.xpose.msra.mxu0 0.0
        %1105 = vmatprep.subr.mxu0 0.0
        %1106 = vmatpush1.xpose.msra.mxu0 0.0
        %1107 = vmatprep.subr.mxu0 0.0
        %1108 = vmatpush1.xpose.msra.mxu0 0.0
        %1109 = vmatprep.subr.mxu0 0.0
        %1110 = vmatpush1.xpose.msra.mxu0 0.0
        %1111 = vmatprep.subr.mxu0 0.0
        %1112 = vmatpush1.xpose.msra.mxu0 %v1079
        %1113 = vmatprep.subr.mxu0 0.0
        %1114 = vmatpush2.xpose.msra.mxu0 0.0
        %1115 = vmatprep.subr.mxu0 0.0
        %1116 = vmatpush2.xpose.msra.mxu0 0.0
        %1117 = vmatprep.subr.mxu0 0.0
        %1118 = vmatpush2.xpose.msra.mxu0 0.0
        %1119 = vmatprep.subr.mxu0 0.0
        %1120 = vmatpush2.xpose.msra.mxu0 0.0
        %1121 = vmatprep.subr.mxu0 0.0
        %1122 = vmatpush2.xpose.msra.mxu0 0.0
        %1123 = vmatprep.subr.mxu0 0.0
        %1124 = vmatpush2.xpose.msra.mxu0 0.0
        %1125 = vmatprep.subr.mxu0 0.0
        %1126 = vmatpush2.xpose.msra.mxu0 0.0
        %1127 = vmatprep.subr.mxu0 0.0
        %1128 = vmatpush2.xpose.msra.mxu0 0.0
        %1129 = vmatprep.subr.mxu0 0.0
        %1130 = vmatpush2.xpose.msra.mxu0 0.0
        %1131 = vmatprep.subr.mxu0 0.0
        %1132 = vmatpush2.xpose.msra.mxu0 0.0
        %1133 = vmatprep.subr.mxu0 0.0
        %1134 = vmatpush2.xpose.msra.mxu0 0.0
        %1135 = vmatprep.subr.mxu0 0.0
        %1136 = vmatpush2.xpose.msra.mxu0 0.0
        %1137 = vmatprep.subr.mxu0 0.0
        %1138 = vmatpush2.xpose.msra.mxu0 0.0
        %1139 = vmatprep.subr.mxu0 0.0
        %1140 = vmatpush2.xpose.msra.mxu0 0.0
        %1141 = vmatprep.subr.mxu0 0.0
        %1142 = vmatpush2.xpose.msra.mxu0 0.0
        %1143 = vmatprep.subr.mxu0 0.0
        %1144 = vmatpush2.xpose.msra.mxu0 0.0
        %1145 = vmatprep.mubr.f32.mxu0 0.0
        %1146 = vmatmul.mubr.f32.gmra.mxu0 %v1075
        %v1147 = vpop.f32.mrf.mxu0
        %v1148 = vadd.f32 0.0, %v1147
        %v1149 = vpop.f32.mrf.mxu0
        %1150 = vmatprep.mubr.f32.mxu0 0.0
        %1151 = vmatmul.mubr.f32.gmra.mxu0 %v1077
        %v1152 = vpop.f32.mrf.mxu0
        %v1153 = vadd.f32 0.0, %v1152
        %v1154 = vpop.f32.mrf.mxu0
        %1155 = vdwg.mxu0
        %v1156 = vsel %vm576, %v1148, -inf
        %1157 = vmax.xlane.f32.xlu0 %v1156
        %v1158 = vpop.xlane.xlu0 %1157
        %v1159 = vsel %vm576, %v1153, -inf
        %1160 = vmax.xlane.f32.xlu0 %v1159
        %v1161 = vpop.xlane.xlu0 %1160
        %v1162 = vsub.f32 %v1148, %v1158
        %v1163 = vsub.f32 %v1153, %v1161
        %v1164 = vmul.f32 %v1162, 1.442695
        %v1165 = vpow.pop %v1164
        %v1166 = vmul.f32 %v1163, 1.442695
        %v1167 = vpow.pop %v1166
        %v1168 = vsel %vm576, %v1165, 0.0
        %1169 = vadd.xlane.f32.xlu0 %v1168
        %v1170 = vpop.xlane.xlu0 %1169
        %v1171 = vsel %vm576, %v1167, 0.0
        %1172 = vadd.xlane.f32.xlu0 %v1171
        %v1173 = vpop.xlane.xlu0 %1172
        %v1174 = vrcp.pop %v1170
        %v1175 = vrcp.pop %v1173
        %v1176 = vmul.f32 %v1165, %v1174
        %v1177 = vmul.f32 %v1167, %v1175
        %1178 = vrot.lane.b32.xlu0 %v486, 16
        %v1179 = vpop.permute.xlu0 %1178
        %v1182 = vsel %vm576, %v1176, 0
        %v1185 = vsel %vm576, %v1177, 0
        %1187 = vmatprep.subr.mxu0 0.0
        %1188 = vmatpush1.msra.mxu0 0.0
        %1189 = vmatprep.subr.mxu0 0.0
        %1190 = vmatpush1.msra.mxu0 0.0
        %1191 = vmatprep.subr.mxu0 0.0
        %1192 = vmatpush1.msra.mxu0 0.0
        %1193 = vmatprep.subr.mxu0 0.0
        %1194 = vmatpush1.msra.mxu0 0.0
        %1195 = vmatprep.subr.mxu0 0.0
        %1196 = vmatpush1.msra.mxu0 0.0
        %1197 = vmatprep.subr.mxu0 0.0
        %1198 = vmatpush1.msra.mxu0 0.0
        %1199 = vmatprep.subr.mxu0 0.0
        %1200 = vmatpush1.msra.mxu0 0.0
        %1201 = vmatprep.subr.mxu0 0.0
        %1202 = vmatpush1.msra.mxu0 0.0
        %1203 = vmatprep.subr.mxu0 0.0
        %1204 = vmatpush1.msra.mxu0 0.0
        %1205 = vmatprep.subr.mxu0 0.0
        %1206 = vmatpush1.msra.mxu0 0.0
        %1207 = vmatprep.subr.mxu0 0.0
        %1208 = vmatpush1.msra.mxu0 0.0
        %1209 = vmatprep.subr.mxu0 0.0
        %1210 = vmatpush1.msra.mxu0 0.0
        %1211 = vmatprep.subr.mxu0 0.0
        %1212 = vmatpush1.msra.mxu0 0.0
        %1213 = vmatprep.subr.mxu0 0.0
        %1214 = vmatpush1.msra.mxu0 0.0
        %1215 = vmatprep.subr.mxu0 0.0
        %1216 = vmatpush1.msra.mxu0 0.0
        %1217 = vmatprep.subr.mxu0 0.0
        %1218 = vmatpush1.msra.mxu0 %v1179
        %1219 = vmatprep.subr.mxu0 0.0
        %1220 = vmatpush2.msra.mxu0 0.0
        %1221 = vmatprep.subr.mxu0 0.0
        %1222 = vmatpush2.msra.mxu0 0.0
        %1223 = vmatprep.subr.mxu0 0.0
        %1224 = vmatpush2.msra.mxu0 0.0
        %1225 = vmatprep.subr.mxu0 0.0
        %1226 = vmatpush2.msra.mxu0 0.0
        %1227 = vmatprep.subr.mxu0 0.0
        %1228 = vmatpush2.msra.mxu0 0.0
        %1229 = vmatprep.subr.mxu0 0.0
        %1230 = vmatpush2.msra.mxu0 0.0
        %1231 = vmatprep.subr.mxu0 0.0
        %1232 = vmatpush2.msra.mxu0 0.0
        %1233 = vmatprep.subr.mxu0 0.0
        %1234 = vmatpush2.msra.mxu0 0.0
        %1235 = vmatprep.subr.mxu0 0.0
        %1236 = vmatpush2.msra.mxu0 0.0
        %1237 = vmatprep.subr.mxu0 0.0
        %1238 = vmatpush2.msra.mxu0 0.0
        %1239 = vmatprep.subr.mxu0 0.0
        %1240 = vmatpush2.msra.mxu0 0.0
        %1241 = vmatprep.subr.mxu0 0.0
        %1242 = vmatpush2.msra.mxu0 0.0
        %1243 = vmatprep.subr.mxu0 0.0
        %1244 = vmatpush2.msra.mxu0 0.0
        %1245 = vmatprep.subr.mxu0 0.0
        %1246 = vmatpush2.msra.mxu0 0.0
        %1247 = vmatprep.subr.mxu0 0.0
        %1248 = vmatpush2.msra.mxu0 0.0
        %1249 = vmatprep.subr.mxu0 0.0
        %1250 = vmatpush2.msra.mxu0 0.0
        %1251 = vmatprep.mubr.f32.mxu0 0.0
        %1252 = vmatmul.mubr.f32.gmra.mxu0 %v1182
        %v1253 = vpop.f32.mrf.mxu0
        %v1254 = vadd.f32 0.0, %v1253
        %v1255 = vpop.f32.mrf.mxu0
        %1256 = vmatprep.mubr.f32.mxu0 0.0
        %1257 = vmatmul.mubr.f32.gmra.mxu0 %v1185
        %v1258 = vpop.f32.mrf.mxu0
        %v1259 = vadd.f32 0.0, %v1258
        %v1260 = vpop.f32.mrf.mxu0
        %1261 = vdwg.mxu0
        %1264 = vrot.lane.b32.xlu0 %v868, 16
        %v1265 = vpop.permute.xlu0 %1264
        %1266 = vrot.lane.b32.xlu0 %v873, 16
        %v1267 = vpop.permute.xlu0 %1266
        %1272 = vrot.lane.b32.xlu0 %v1061, 32
        %v1273 = vpop.permute.xlu0 %1272
        %1274 = vrot.lane.b32.xlu0 %v1066, 32
        %v1275 = vpop.permute.xlu0 %1274
        %1280 = vrot.lane.b32.xlu0 %v1254, 48
        %v1281 = vpop.permute.xlu0 %1280
        %1282 = vrot.lane.b32.xlu0 %v1259, 48
        %v1283 = vpop.permute.xlu0 %1282
        %v1286 = vsel %vm491, %v675, %v1265
        %v1287 = vsel %vm491, %v680, %v1267
        %v1288 = vsel %vm330, %v1286, %v1273
        %v1289 = vsel %vm330, %v1287, %v1275
        %vm1290 = vcmask 392192
        %v1291 = vsel %vm1290, %v1288, %v1281
        %v1292 = vsel %vm1290, %v1289, %v1283
        %v1293 = vld [vmem:[#allocation10] sm:$0xff]
        %v1294 = vld [vmem:[#allocation10 + $0x8] sm:$0xff]
        %v1295 = vld [vmem:[#allocation10 + $0x10] sm:$0xff]
        %v1296 = vld [vmem:[#allocation10 + $0x18] sm:$0xff]
        %v1297 = vld [vmem:[#allocation10 + $0x20] sm:$0xff]
        %v1298 = vld [vmem:[#allocation10 + $0x28] sm:$0xff]
        %v1299 = vld [vmem:[#allocation10 + $0x30] sm:$0xff]
        %v1300 = vld [vmem:[#allocation10 + $0x38] sm:$0xff]
        %vm1301 = vcmask 523264
        %v1303 = vsel %vm1301, %v1291, 0
        %v1306 = vsel %vm1301, %v1292, 0
        %1308 = vmatprep.subr.mxu0 0.0
        %1309 = vmatpush1.msra.mxu0 0.0
        %1310 = vmatprep.subr.mxu0 0.0
        %1311 = vmatpush1.msra.mxu0 0.0
        %1312 = vmatprep.subr.mxu0 0.0
        %1313 = vmatpush1.msra.mxu0 0.0
        %1314 = vmatprep.subr.mxu0 0.0
        %1315 = vmatpush1.msra.mxu0 0.0
        %1316 = vmatprep.subr.mxu0 0.0
        %1317 = vmatpush1.msra.mxu0 0.0
        %1318 = vmatprep.subr.mxu0 0.0
        %1319 = vmatpush1.msra.mxu0 0.0
        %1320 = vmatprep.subr.mxu0 0.0
        %1321 = vmatpush1.msra.mxu0 0.0
        %1322 = vmatprep.subr.mxu0 0.0
        %1323 = vmatpush1.msra.mxu0 0.0
        %1324 = vmatprep.subr.mxu0 0.0
        %1325 = vmatpush1.msra.mxu0 %v1300
        %1326 = vmatprep.subr.mxu0 0.0
        %1327 = vmatpush1.msra.mxu0 %v1299
        %1328 = vmatprep.subr.mxu0 0.0
        %1329 = vmatpush1.msra.mxu0 %v1298
        %1330 = vmatprep.subr.mxu0 0.0
        %1331 = vmatpush1.msra.mxu0 %v1297
        %1332 = vmatprep.subr.mxu0 0.0
        %1333 = vmatpush1.msra.mxu0 %v1296
        %1334 = vmatprep.subr.mxu0 0.0
        %1335 = vmatpush1.msra.mxu0 %v1295
        %1336 = vmatprep.subr.mxu0 0.0
        %1337 = vmatpush1.msra.mxu0 %v1294
        %1338 = vmatprep.subr.mxu0 0.0
        %1339 = vmatpush1.msra.mxu0 %v1293
        %1340 = vmatprep.subr.mxu0 0.0
        %1341 = vmatpush2.msra.mxu0 0.0
        %1342 = vmatprep.subr.mxu0 0.0
        %1343 = vmatpush2.msra.mxu0 0.0
        %1344 = vmatprep.subr.mxu0 0.0
        %1345 = vmatpush2.msra.mxu0 0.0
        %1346 = vmatprep.subr.mxu0 0.0
        %1347 = vmatpush2.msra.mxu0 0.0
        %1348 = vmatprep.subr.mxu0 0.0
        %1349 = vmatpush2.msra.mxu0 0.0
        %1350 = vmatprep.subr.mxu0 0.0
        %1351 = vmatpush2.msra.mxu0 0.0
        %1352 = vmatprep.subr.mxu0 0.0
        %1353 = vmatpush2.msra.mxu0 0.0
        %1354 = vmatprep.subr.mxu0 0.0
        %1355 = vmatpush2.msra.mxu0 0.0
        %1356 = vmatprep.subr.mxu0 0.0
        %1357 = vmatpush2.msra.mxu0 0.0
        %1358 = vmatprep.subr.mxu0 0.0
        %1359 = vmatpush2.msra.mxu0 0.0
        %1360 = vmatprep.subr.mxu0 0.0
        %1361 = vmatpush2.msra.mxu0 0.0
        %1362 = vmatprep.subr.mxu0 0.0
        %1363 = vmatpush2.msra.mxu0 0.0
        %1364 = vmatprep.subr.mxu0 0.0
        %1365 = vmatpush2.msra.mxu0 0.0
        %1366 = vmatprep.subr.mxu0 0.0
        %1367 = vmatpush2.msra.mxu0 0.0
        %1368 = vmatprep.subr.mxu0 0.0
        %1369 = vmatpush2.msra.mxu0 0.0
        %1370 = vmatprep.subr.mxu0 0.0
        %1371 = vmatpush2.msra.mxu0 0.0
        %1372 = vmatprep.mubr.f32.mxu0 0.0
        %1373 = vmatmul.mubr.f32.gmra.mxu0 %v1303
        %v1374 = vpop.f32.mrf.mxu0
        %v1375 = vadd.f32 0.0, %v1374
        %v1376 = vpop.f32.mrf.mxu0
        %1377 = vmatprep.mubr.f32.mxu0 0.0
        %1378 = vmatmul.mubr.f32.gmra.mxu0 %v1306
        %v1379 = vpop.f32.mrf.mxu0
        %v1380 = vadd.f32 0.0, %v1379
        %v1381 = vpop.f32.mrf.mxu0
        %1382 = vdwg.mxu0
        %1383 = vst [vmem:[%s322] sm:$0xff] %v1375
        %1384 = vst [vmem:[%s322 + $0x8] sm:$0xff] %v1380
        %s1385 = sand.u32 %s149, 1
        %s1386 = scalar_lea.sflag [#allocation4], %s1385
        %s1387 = sand.u32 %s149, 1
        %s1388 = smul.addr %s1387, 16
        %s1389 = scalar_lea.vmem [#allocation11], %s1388
        // Predicated region
        $region61: #{tpu_custom_call.1} parent=39 // pred_check
          %p1390 = pneg %p159
        $region62: #{tpu_custom_call.1} parent=39 // pred_check_branch
          %1392 = sbr.rel (%p1390) target = $region64
        $region63: #{tpu_custom_call.1} parent=39 // pred_region
          %s1394 = ssub.s32 256, 256
          %1395 = vsyncadd %s1386, %s1394
          %s1396 = smul.addr %s26, 2
          %s1397 = smul.addr %s1396, 128
          %s1398 = scalar_lea.hbm %s5, %s1397
          %s1399 = sshll.u32 %s1389, 4
          %s1400 = int_to_ptr.vmem [resolvable:$true] %s1399
          %1405 = dma.vmem_to_hbm [thread:$0]  %s1400, 256, %s1398, %s1386, 128, 128, 8
        $region64: #{tpu_custom_call.1} parent=39 // pred_fallthru
          _
      $region40: #{tpu_custom_call.1} parent=5 // pred_fallthru
        _
      %p1406 = scmp.le.s32.totalorder 2, %s21
      // Predicated region
      $region65: #{tpu_custom_call.1} parent=5 // pred_check
        %p1407 = pneg %p1406
      $region66: #{tpu_custom_call.1} parent=5 // pred_check_branch
        %1409 = sbr.rel (%p1407) target = $region68
      $region67: #{tpu_custom_call.1} parent=5 // pred_region
        %s1410 = ssub.s32 %s21, 2
        // Predicated region
        $region69: #{tpu_custom_call.1} parent=67 // pred_check
          %p1411 = pneg %p165
        $region70: #{tpu_custom_call.1} parent=67 // pred_check_branch
          %1413 = sbr.rel (%p1411) target = $region72
        $region71: #{tpu_custom_call.1} parent=67 // pred_region
          %s1414 = sand.u32 %s150, 1
          %s1415 = scalar_lea.sflag [#allocation4], %s1414
          %s1416 = sand.u32 %s150, 1
          %s1417 = smul.addr %s1416, 16
          %s1418 = scalar_lea.vmem [#allocation11], %s1417
          %1419 = dma.done %s1415, 256
        $region72: #{tpu_custom_call.1} parent=67 // pred_fallthru
          _
      $region68: #{tpu_custom_call.1} parent=5 // pred_fallthru
        _
    $region6: #{tpu_custom_call.1} parent=1 // loop_footer
      %s25 = sadd.s32 1, %s21
    $region7: #{tpu_custom_call.1} parent=1 // loop_footer_branch
      %20 = sbr.rel target = $region3
    $region8: #{tpu_custom_call.1} parent=1 // loop_exit
      _
    %1420 = vsyncpa [#allocation3], 1
    %s1421 = scalar_lea.sflag [#allocation3], 1
    %1422 = vsyncpa %s1421, 1
    %1423 = vsyncpa [#allocation6], 1
    %s1424 = scalar_lea.sflag [#allocation6], 1
    %1425 = vsyncpa %s1424, 1
    %1426 = vsyncpa [#allocation9], 1
    %1427 = vsyncpa [#allocation4], 1
    %s1428 = scalar_lea.sflag [#allocation4], 1
    %1429 = vsyncpa %s1428, 1

</llo_original>
